<compile_context>
chip_gen: v7x
topology: tpu7x:2x2x1
jax: 0.10.0
libtpu: 0.0.40
codegen_flags: <defaults>
</compile_context>

<pallas_src>
import numpy as np
import jax
import jax.numpy as jnp
from jax.experimental import pallas as pl
from jax.experimental.pallas import tpu as pltpu


def make_stgcn_call(N_pad, Nb, C_pad, C_out, TV, K, kt, dtype):
    assert N_pad % Nb == 0
    n_steps = N_pad // Nb
    NbC = Nb * C_out
    pad = (kt - 1) // 2
    f32, bf16 = jnp.float32, jnp.bfloat16

    def kernel(x_ref, w1_ref, b_ref, sh1_ref, wt_ref, s_ref, out_ref):
        # x_ref  : (Nb*C_pad, TV)              bf16, rows (sample, in-channel), lane-dense
        # w1_ref : ((K+1)*Nb*C_out, Nb*C_pad)  bf16, block-diag fused 1x1 weights (gcn + residual)
        # b_ref  : (K, TV, TV)                 bf16, kron(I_T, A[k])
        # sh1_ref: (C_out, TV)                 f32,  pre-ReLU shift (gcn bias thru A + BN1 shift)
        # wt_ref : (kt, Nb*C_out, Nb*C_out)    bf16, block-diag temporal taps (BN2 scale folded)
        # s_ref  : (max(kt-1,1), TV, TV)       bf16, temporal shift matrices (zero boundary)
        # out_ref: (Nb*C_out, TV)              rows (sample, out-channel)

        # ---- fused 1x1 convs (K gcn branches + residual) : one MXU matmul ----
        yfull = jnp.dot(w1_ref[...], x_ref[...],
                        preferred_element_type=f32)            # ((K+1)*NbC, TV)

        # ---- graph contraction: z[(n,c),tw] = sum_k yg_k[(n,c),tv] * kron(I_T,A[k])[tv,tw] ----
        z = jnp.dot(yfull[0:NbC, :].astype(bf16), b_ref[0],
                    preferred_element_type=f32)
        for k in range(1, K):                                  # K static & small
            z = z + jnp.dot(yfull[k * NbC:(k + 1) * NbC, :].astype(bf16), b_ref[k],
                            preferred_element_type=f32)

        # ---- BN1 (scale folded into W1; bias routed through A lives in sh1) + ReLU ----
        z = jnp.maximum(z.reshape(Nb, C_out, TV) + sh1_ref[...], 0.0)
        z = z.reshape(NbC, TV).astype(bf16)

        # ---- temporal (kt,1) conv, stride 1, zero padding; BN2 scale folded into wt ----
        acc = yfull[K * NbC:, :]                               # residual rows (+ all folded shifts)
        for dt in range(kt):
            if dt == pad:
                tap = z
            else:
                si = dt if dt < pad else dt - 1
                tap = jnp.dot(z, s_ref[si],
                              preferred_element_type=f32).astype(bf16)
            acc = acc + jnp.dot(wt_ref[dt], tap, preferred_element_type=f32)

        out_ref[...] = jnp.maximum(acc, 0.0).astype(out_ref.dtype)

    def const_spec(shape):
        return pl.BlockSpec(shape, lambda i: (0,) * len(shape))

    in_specs = [
        pl.BlockSpec((Nb * C_pad, TV), lambda i: (i, 0)),      # x   (per-step block)
        const_spec(((K + 1) * NbC, Nb * C_pad)),               # W1  (grid-invariant)
        const_spec((K, TV, TV)),                               # B
        const_spec((C_out, TV)),                               # shift1
        const_spec((kt, NbC, NbC)),                            # Wt block-diag
        const_spec((max(kt - 1, 1), TV, TV)),                  # temporal shift matrices
    ]
    out_specs = pl.BlockSpec((NbC, TV), lambda i: (i, 0))

    return pl.pallas_call(
        kernel,
        out_shape=jax.ShapeDtypeStruct((N_pad * C_out, TV), dtype),
        grid=(n_steps,),
        in_specs=in_specs,
        out_specs=out_specs,
        compiler_params=pltpu.CompilerParams(
            dimension_semantics=("parallel",),
            # toy shapes need < 2 MiB/step; sized generously for larger Nb (re-derive at
            # production sizes and keep headroom under the 64 MiB/TC limit of v7x).
            vmem_limit_bytes=32 * 1024 * 1024,
        ),
    )


def st_gcn_forward(x, A, params, Nb=None):
    """relu(tcn(gcn(x, A)) + residual(x)); returns (out, A) like the PyTorch module."""
    (Wg, bg, s1, b1, Wt, bt, s2, b2, Wr, br, sr, shr) = params
    N, C_in, T, V = x.shape
    K = A.shape[0]
    C_out = Wr.shape[0]
    kt = Wt.shape[0]
    pad = (kt - 1) // 2
    TV = T * V
    f32, bf16 = jnp.float32, jnp.bfloat16

    if Nb is None:
        Nb = min(N, 16)            # 16 (v5e) / 32 (v6e, v7x) at realistic batch sizes
    N_pad = ((N + Nb - 1) // Nb) * Nb
    C_pad = ((C_in + 1 + 7) // 8) * 8   # +1 constant-one bias channel, pad to sublane tile

    s1v = s1.reshape(C_out).astype(f32)
    b1v = b1.reshape(C_out).astype(f32)
    s2v = s2.reshape(C_out).astype(f32)
    b2v = b2.reshape(C_out).astype(f32)
    srv = sr.reshape(C_out).astype(f32)
    shrv = shr.reshape(C_out).astype(f32)
    bgv = bg.reshape(K, C_out).astype(f32)
    btv = bt.reshape(C_out).astype(f32)
    brv = br.reshape(C_out).astype(f32)

    # ---- input: lane-dense (T*V on lanes), bias channel appended, batch padded ----
    x_aug = jnp.zeros((N_pad, C_pad, TV), f32)
    x_aug = x_aug.at[:N, :C_in, :].set(x.reshape(N, C_in, TV).astype(f32))
    x_aug = x_aug.at[:N, C_in, :].set(1.0)
    x_in = x_aug.reshape(N_pad * C_pad, TV).astype(bf16)

    # ---- B[k] = kron(I_T, A[k]): graph contraction as a lane-dense (TV,TV) matmul ----
    eyeT = jnp.eye(T, dtype=f32)
    B = jnp.einsum('ts,kvw->ktvsw', eyeT, A.astype(f32)).reshape(K, TV, TV).astype(bf16)

    # ---- fused 1x1 conv weights (K gcn branches + residual), BN scales folded,
    #      residual bias + every post-conv additive term carried by the bias column ----
    Wg_s = Wg.astype(f32).reshape(K, C_out, C_in) * s1v[None, :, None]
    Wr_s = Wr.astype(f32) * srv[:, None]
    shift_fin = s2v * btv + b2v + srv * brv + shrv             # (C_out,)
    Wfused = jnp.zeros((K + 1, C_out, C_pad), f32)
    Wfused = Wfused.at[:K, :, :C_in].set(Wg_s)
    Wfused = Wfused.at[K, :, :C_in].set(Wr_s)
    Wfused = Wfused.at[K, :, C_in].set(shift_fin)
    eyeNb = jnp.eye(Nb, dtype=f32)
    # block-diagonal over the Nb samples of a grid step; rows (branch, sample, channel)
    W1_bd = jnp.einsum('gco,nm->gncmo', Wfused, eyeNb)
    W1_bd = W1_bd.reshape((K + 1) * Nb * C_out, Nb * C_pad).astype(bf16)

    # ---- pre-ReLU shift: gcn bias routed through A (column sums) + BN1 shift ----
    colsum = jnp.sum(A.astype(f32), axis=1)                    # (K, V): sum_v A[k, v, w]
    bias_w = jnp.einsum('kc,kw->cw', bgv, colsum)              # (C_out, V)
    shift1 = s1v[:, None] * bias_w + b1v[:, None]              # (C_out, V)
    shift1 = jnp.broadcast_to(shift1[:, None, :], (C_out, T, V)).reshape(C_out, TV)

    # ---- temporal conv weights: BN2 scale folded, block-diag over samples ----
    Wt_s = Wt.astype(f32) * s2v[None, :, None]                 # (kt, C_out, C_out)
    Wt_bd = jnp.einsum('doc,nm->dnomc', Wt_s, eyeNb)
    Wt_bd = Wt_bd.reshape(kt, Nb * C_out, Nb * C_out).astype(bf16)

    # ---- temporal shift matrices with zero boundary (the conv's zero padding) ----
    eyeV = jnp.eye(V, dtype=f32)
    shift_mats = []
    for dt in range(kt):
        if dt == pad:
            continue
        d = dt - pad
        shiftT = jnp.eye(T, T, k=-d, dtype=f32)                # [ts, t] = 1 iff ts == t + d
        shift_mats.append(jnp.kron(shiftT, eyeV))
    if shift_mats:
        S = jnp.stack(shift_mats, axis=0).astype(bf16)         # (kt-1, TV, TV)
    else:
        S = jnp.zeros((1, TV, TV), bf16)                       # unused (kt == 1)

    call = make_stgcn_call(N_pad, Nb, C_pad, C_out, TV, K, kt, x.dtype)
    out2d = call(x_in, W1_bd, B, shift1, Wt_bd, S)             # (N_pad*C_out, TV)
    out = out2d.reshape(N_pad, C_out, T, V)[:N]
    return out, A


# ----------------------------- reference (pure JAX) -----------------------------
def reference_forward(x, A, params):
    (Wg, bg, s1, b1, Wt, bt, s2, b2, Wr, br, sr, shr) = params
    N, C_in, T, V = x.shape
    K = A.shape[0]
    C_out = Wr.shape[0]
    kt = Wt.shape[0]
    pad = (kt - 1) // 2
    y = jnp.einsum('oc,nctv->notv', Wg, x) + bg[None, :, :, None]
    y = y.reshape(N, K, C_out, T, V)
    z = jnp.einsum('nkctv,kvw->nctw', y, A)
    z = jnp.maximum(z * s1[None, :, :, None] + b1[None, :, :, None], 0.0)
    zp = jnp.pad(z, ((0, 0), (0, 0), (pad, pad), (0, 0)))
    conv = sum(jnp.einsum('oc,nctv->notv', Wt[dt], zp[:, :, dt:dt + T, :])
               for dt in range(kt))
    conv = conv + bt[None, :, :, None]
    conv = conv * s2[None, :, :, None] + b2[None, :, :, None]
    r = jnp.einsum('oc,nctv->notv', Wr, x) + br[None, :, :, None]
    r = r * sr[None, :, :, None] + shr[None, :, :, None]
    return jnp.maximum(conv + r, 0.0), A


# ----------------------------- param construction -----------------------------
def folded_bn(key, c):
    k1, k2, k3, k4 = jax.random.split(key, 4)
    gamma = 1.0 + 0.1 * jax.random.normal(k1, (c,), jnp.float32)
    beta = 0.1 * jax.random.normal(k2, (c,), jnp.float32)
    mean = 0.1 * jax.random.normal(k3, (c,), jnp.float32)
    var = 1.0 + 0.1 * jnp.abs(jax.random.normal(k4, (c,), jnp.float32))
    scale = gamma * jax.lax.rsqrt(var + 1e-5)
    shift = beta - mean * scale
    return scale.reshape(c, 1), shift.reshape(c, 1)


if __name__ == "__main__":
    # Small shapes: N=8 batch, C_in=4, C_out=8, T=8 frames, V=16 graph nodes,
    # kernel_size = (kt=3 temporal, K=3 spatial), stride=1, dropout=0, residual=True.
    # Nb=4 samples per grid step -> grid=(2,) so the "parallel" axis has work for 2 TCs.
    N, C_in, C_out, T, V, K, kt = 8, 4, 8, 8, 16, 3, 3
    Nb = 4

    key = jax.random.PRNGKey(0)
    ks = jax.random.split(key, 10)

    x = jax.random.normal(ks[0], (N, C_in, T, V), jnp.float32)
    A_raw = jax.random.uniform(ks[1], (K, V, V), jnp.float32)
    A = A_raw / jnp.sum(A_raw, axis=-1, keepdims=True)

    # gcn: Conv2d(C_in, C_out*K, kernel=(1,1)) with bias
    Wg = 0.2 * jax.random.normal(ks[2], (K * C_out, C_in), jnp.float32)
    bg = 0.1 * jax.random.normal(ks[3], (K * C_out,), jnp.float32).reshape(-1, 1)
    # tcn: BN1 -> ReLU -> Conv2d(C_out, C_out, (kt,1), stride 1, pad ((kt-1)//2,0)) -> BN2 -> Dropout(0)
    s1, b1 = folded_bn(ks[4], C_out)
    Wt = 0.2 * jax.random.normal(ks[5], (kt, C_out, C_out), jnp.float32)  # Wt[dt, o, c]
    bt = 0.1 * jax.random.normal(ks[6], (C_out,), jnp.float32).reshape(-1, 1)
    s2, b2 = folded_bn(ks[7], C_out)
    # residual: Conv2d(C_in, C_out, 1) -> BN   (taken because C_in != C_out)
    Wr = 0.2 * jax.random.normal(ks[8], (C_out, C_in), jnp.float32)
    br = 0.1 * jax.random.normal(ks[9], (C_out,), jnp.float32).reshape(-1, 1)
    sr, shr = folded_bn(jax.random.fold_in(key, 123), C_out)

    params = (Wg, bg, s1, b1, Wt, bt, s2, b2, Wr, br, sr, shr)

    out, A_out = st_gcn_forward(x, A, params, Nb=Nb)
    out = jax.block_until_ready(out)

    ref_out, _ = reference_forward(x, A, params)
    # bf16 MXU operands with f32 accumulation -> slightly loosened tolerance.
    np.testing.assert_allclose(np.asarray(out), np.asarray(ref_out),
                               rtol=2e-2, atol=2e-2)
    assert out.shape == (N, C_out, T, V)
    assert A_out.shape == (K, V, V)

    print("KERNEL_OK")
</pallas_src>

<mosaic_0001>
module attributes {stable_mosaic.version = 11 : i64} {
  func.func @kernel(%arg0: i32, %arg1: memref<32x128xbf16, #tpu.memory_space<vmem>>, %arg2: memref<128x32xbf16, #tpu.memory_space<vmem>>, %arg3: memref<3x128x128xbf16, #tpu.memory_space<vmem>>, %arg4: memref<8x128xf32, #tpu.memory_space<vmem>>, %arg5: memref<3x32x32xbf16, #tpu.memory_space<vmem>>, %arg6: memref<2x128x128xbf16, #tpu.memory_space<vmem>>, %arg7: memref<32x128xf32, #tpu.memory_space<vmem>>) attributes {dimension_semantics = [#tpu.dimension_semantics<parallel>], iteration_bounds = array<i64: 2>, scalar_prefetch = 0 : i64, scratch_operands = 0 : i64, tpu.core_type = #tpu.core_type<tc>, window_params = [{transform_indices = @transform_0, window_bounds = array<i64: 32, 128>}, {pipeline_mode = #tpu.pipeline_mode<synchronous>, transform_indices = @transform_1, window_bounds = array<i64: 128, 32>}, {pipeline_mode = #tpu.pipeline_mode<synchronous>, transform_indices = @transform_2, window_bounds = array<i64: 3, 128, 128>}, {pipeline_mode = #tpu.pipeline_mode<synchronous>, transform_indices = @transform_3, window_bounds = array<i64: 8, 128>}, {pipeline_mode = #tpu.pipeline_mode<synchronous>, transform_indices = @transform_4, window_bounds = array<i64: 3, 32, 32>}, {pipeline_mode = #tpu.pipeline_mode<synchronous>, transform_indices = @transform_5, window_bounds = array<i64: 2, 128, 128>}, {transform_indices = @transform_6, window_bounds = array<i64: 32, 128>}]} {
    %c0 = arith.constant 0 : index
    %c0_0 = arith.constant 0 : index
    %0 = vector.load %arg2[%c0, %c0_0] : memref<128x32xbf16, #tpu.memory_space<vmem>>, vector<128x32xbf16>
    %c0_1 = arith.constant 0 : index
    %c0_2 = arith.constant 0 : index
    %1 = vector.load %arg1[%c0_1, %c0_2] : memref<32x128xbf16, #tpu.memory_space<vmem>>, vector<32x128xbf16>
    %cst = arith.constant dense<0.000000e+00> : vector<128x128xf32>
    %2 = tpu.matmul %0, %1, %cst {dimension_numbers = #tpu.dot_dimension_numbers<[1], [0], [0], [1], [0, 0, 1, 1], [], []>} : vector<128x32xbf16>, vector<32x128xbf16>, vector<128x128xf32> -> vector<128x128xf32>
    %3 = vector.extract_strided_slice %2 {offsets = [0, 0], sizes = [32, 128], strides = [1, 1]} : vector<128x128xf32> to vector<32x128xf32>
    %4 = arith.truncf %3 : vector<32x128xf32> to vector<32x128xbf16>
    %c0_3 = arith.constant 0 : index
    %c0_4 = arith.constant 0 : index
    %c0_5 = arith.constant 0 : index
    %5 = vector.load %arg3[%c0_3, %c0_4, %c0_5] : memref<3x128x128xbf16, #tpu.memory_space<vmem>>, vector<1x128x128xbf16>
    %6 = vector.shape_cast %5 : vector<1x128x128xbf16> to vector<128x128xbf16>
    %cst_6 = arith.constant dense<0.000000e+00> : vector<32x128xf32>
    %7 = tpu.matmul %4, %6, %cst_6 {dimension_numbers = #tpu.dot_dimension_numbers<[1], [0], [0], [1], [0, 0, 1, 1], [], []>} : vector<32x128xbf16>, vector<128x128xbf16>, vector<32x128xf32> -> vector<32x128xf32>
    %8 = vector.extract_strided_slice %2 {offsets = [32, 0], sizes = [32, 128], strides = [1, 1]} : vector<128x128xf32> to vector<32x128xf32>
    %9 = arith.truncf %8 : vector<32x128xf32> to vector<32x128xbf16>
    %c1 = arith.constant 1 : index
    %c0_7 = arith.constant 0 : index
    %c0_8 = arith.constant 0 : index
    %10 = vector.load %arg3[%c1, %c0_7, %c0_8] : memref<3x128x128xbf16, #tpu.memory_space<vmem>>, vector<1x128x128xbf16>
    %11 = vector.shape_cast %10 : vector<1x128x128xbf16> to vector<128x128xbf16>
    %cst_9 = arith.constant dense<0.000000e+00> : vector<32x128xf32>
    %12 = tpu.matmul %9, %11, %cst_9 {dimension_numbers = #tpu.dot_dimension_numbers<[1], [0], [0], [1], [0, 0, 1, 1], [], []>} : vector<32x128xbf16>, vector<128x128xbf16>, vector<32x128xf32> -> vector<32x128xf32>
    %13 = arith.addf %7, %12 : vector<32x128xf32>
    %14 = vector.extract_strided_slice %2 {offsets = [64, 0], sizes = [32, 128], strides = [1, 1]} : vector<128x128xf32> to vector<32x128xf32>
    %15 = arith.truncf %14 : vector<32x128xf32> to vector<32x128xbf16>
    %c2 = arith.constant 2 : index
    %c0_10 = arith.constant 0 : index
    %c0_11 = arith.constant 0 : index
    %16 = vector.load %arg3[%c2, %c0_10, %c0_11] : memref<3x128x128xbf16, #tpu.memory_space<vmem>>, vector<1x128x128xbf16>
    %17 = vector.shape_cast %16 : vector<1x128x128xbf16> to vector<128x128xbf16>
    %cst_12 = arith.constant dense<0.000000e+00> : vector<32x128xf32>
    %18 = tpu.matmul %15, %17, %cst_12 {dimension_numbers = #tpu.dot_dimension_numbers<[1], [0], [0], [1], [0, 0, 1, 1], [], []>} : vector<32x128xbf16>, vector<128x128xbf16>, vector<32x128xf32> -> vector<32x128xf32>
    %19 = arith.addf %13, %18 : vector<32x128xf32>
    %20 = vector.shape_cast %19 : vector<32x128xf32> to vector<4x8x128xf32>
    %c0_13 = arith.constant 0 : index
    %c0_14 = arith.constant 0 : index
    %21 = vector.load %arg4[%c0_13, %c0_14] : memref<8x128xf32, #tpu.memory_space<vmem>>, vector<8x128xf32>
    %22 = vector.shape_cast %21 : vector<8x128xf32> to vector<1x8x128xf32>
    %23 = vector.broadcast %22 : vector<1x8x128xf32> to vector<4x8x128xf32>
    %24 = arith.addf %20, %23 : vector<4x8x128xf32>
    %cst_15 = arith.constant 0.000000e+00 : f32
    %25 = vector.broadcast %cst_15 : f32 to vector<4x8x128xf32>
    %26 = arith.maximumf %24, %25 : vector<4x8x128xf32>
    %27 = vector.shape_cast %26 : vector<4x8x128xf32> to vector<32x128xf32>
    %28 = arith.truncf %27 : vector<32x128xf32> to vector<32x128xbf16>
    %29 = vector.extract_strided_slice %2 {offsets = [96, 0], sizes = [32, 128], strides = [1, 1]} : vector<128x128xf32> to vector<32x128xf32>
    %c0_16 = arith.constant 0 : index
    %c0_17 = arith.constant 0 : index
    %c0_18 = arith.constant 0 : index
    %30 = vector.load %arg6[%c0_16, %c0_17, %c0_18] : memref<2x128x128xbf16, #tpu.memory_space<vmem>>, vector<1x128x128xbf16>
    %31 = vector.shape_cast %30 : vector<1x128x128xbf16> to vector<128x128xbf16>
    %cst_19 = arith.constant dense<0.000000e+00> : vector<32x128xf32>
    %32 = tpu.matmul %28, %31, %cst_19 {dimension_numbers = #tpu.dot_dimension_numbers<[1], [0], [0], [1], [0, 0, 1, 1], [], []>} : vector<32x128xbf16>, vector<128x128xbf16>, vector<32x128xf32> -> vector<32x128xf32>
    %33 = arith.truncf %32 : vector<32x128xf32> to vector<32x128xbf16>
    %c0_20 = arith.constant 0 : index
    %c0_21 = arith.constant 0 : index
    %c0_22 = arith.constant 0 : index
    %34 = vector.load %arg5[%c0_20, %c0_21, %c0_22] : memref<3x32x32xbf16, #tpu.memory_space<vmem>>, vector<1x32x32xbf16>
    %35 = vector.shape_cast %34 : vector<1x32x32xbf16> to vector<32x32xbf16>
    %cst_23 = arith.constant dense<0.000000e+00> : vector<32x128xf32>
    %36 = tpu.matmul %35, %33, %cst_23 {dimension_numbers = #tpu.dot_dimension_numbers<[1], [0], [0], [1], [0, 0, 1, 1], [], []>} : vector<32x32xbf16>, vector<32x128xbf16>, vector<32x128xf32> -> vector<32x128xf32>
    %37 = arith.addf %29, %36 : vector<32x128xf32>
    %c1_24 = arith.constant 1 : index
    %c0_25 = arith.constant 0 : index
    %c0_26 = arith.constant 0 : index
    %38 = vector.load %arg5[%c1_24, %c0_25, %c0_26] : memref<3x32x32xbf16, #tpu.memory_space<vmem>>, vector<1x32x32xbf16>
    %39 = vector.shape_cast %38 : vector<1x32x32xbf16> to vector<32x32xbf16>
    %cst_27 = arith.constant dense<0.000000e+00> : vector<32x128xf32>
    %40 = tpu.matmul %39, %28, %cst_27 {dimension_numbers = #tpu.dot_dimension_numbers<[1], [0], [0], [1], [0, 0, 1, 1], [], []>} : vector<32x32xbf16>, vector<32x128xbf16>, vector<32x128xf32> -> vector<32x128xf32>
    %41 = arith.addf %37, %40 : vector<32x128xf32>
    %c1_28 = arith.constant 1 : index
    %c0_29 = arith.constant 0 : index
    %c0_30 = arith.constant 0 : index
    %42 = vector.load %arg6[%c1_28, %c0_29, %c0_30] : memref<2x128x128xbf16, #tpu.memory_space<vmem>>, vector<1x128x128xbf16>
    %43 = vector.shape_cast %42 : vector<1x128x128xbf16> to vector<128x128xbf16>
    %cst_31 = arith.constant dense<0.000000e+00> : vector<32x128xf32>
    %44 = tpu.matmul %28, %43, %cst_31 {dimension_numbers = #tpu.dot_dimension_numbers<[1], [0], [0], [1], [0, 0, 1, 1], [], []>} : vector<32x128xbf16>, vector<128x128xbf16>, vector<32x128xf32> -> vector<32x128xf32>
    %45 = arith.truncf %44 : vector<32x128xf32> to vector<32x128xbf16>
    %c2_32 = arith.constant 2 : index
    %c0_33 = arith.constant 0 : index
    %c0_34 = arith.constant 0 : index
    %46 = vector.load %arg5[%c2_32, %c0_33, %c0_34] : memref<3x32x32xbf16, #tpu.memory_space<vmem>>, vector<1x32x32xbf16>
    %47 = vector.shape_cast %46 : vector<1x32x32xbf16> to vector<32x32xbf16>
    %cst_35 = arith.constant dense<0.000000e+00> : vector<32x128xf32>
    %48 = tpu.matmul %47, %45, %cst_35 {dimension_numbers = #tpu.dot_dimension_numbers<[1], [0], [0], [1], [0, 0, 1, 1], [], []>} : vector<32x32xbf16>, vector<32x128xbf16>, vector<32x128xf32> -> vector<32x128xf32>
    %49 = arith.addf %41, %48 : vector<32x128xf32>
    %cst_36 = arith.constant 0.000000e+00 : f32
    %50 = vector.broadcast %cst_36 : f32 to vector<32x128xf32>
    %51 = arith.maximumf %49, %50 : vector<32x128xf32>
    %c0_37 = arith.constant 0 : index
    %c0_38 = arith.constant 0 : index
    %52 = vector.load %arg7[%c0_37, %c0_38] : memref<32x128xf32, #tpu.memory_space<vmem>>, vector<32x128xf32>
    tpu.vector_store %arg7[%c0_37, %c0_38], %51 {strides = array<i32>} : memref<32x128xf32, #tpu.memory_space<vmem>>, vector<32x128xf32>,
    return
  }
  func.func @transform_0(%arg0: i32) -> (i32, i32) {
    %c0_i32 = arith.constant 0 : i32
    %c0_i32_0 = arith.constant 0 : i32
    return %arg0, %c0_i32 : i32, i32
  }
  func.func @transform_1(%arg0: i32) -> (i32, i32) {
    %c0_i32 = arith.constant 0 : i32
    %c0_i32_0 = arith.constant 0 : i32
    %c0_i32_1 = arith.constant 0 : i32
    return %c0_i32, %c0_i32_0 : i32, i32
  }
  func.func @transform_2(%arg0: i32) -> (i32, i32, i32) {
    %c0_i32 = arith.constant 0 : i32
    %c0_i32_0 = arith.constant 0 : i32
    %c0_i32_1 = arith.constant 0 : i32
    %c0_i32_2 = arith.constant 0 : i32
    return %c0_i32, %c0_i32_0, %c0_i32_1 : i32, i32, i32
  }
  func.func @transform_3(%arg0: i32) -> (i32, i32) {
    %c0_i32 = arith.constant 0 : i32
    %c0_i32_0 = arith.constant 0 : i32
    %c0_i32_1 = arith.constant 0 : i32
    return %c0_i32, %c0_i32_0 : i32, i32
  }
  func.func @transform_4(%arg0: i32) -> (i32, i32, i32) {
    %c0_i32 = arith.constant 0 : i32
    %c0_i32_0 = arith.constant 0 : i32
    %c0_i32_1 = arith.constant 0 : i32
    %c0_i32_2 = arith.constant 0 : i32
    return %c0_i32, %c0_i32_0, %c0_i32_1 : i32, i32, i32
  }
  func.func @transform_5(%arg0: i32) -> (i32, i32, i32) {
    %c0_i32 = arith.constant 0 : i32
    %c0_i32_0 = arith.constant 0 : i32
    %c0_i32_1 = arith.constant 0 : i32
    %c0_i32_2 = arith.constant 0 : i32
    return %c0_i32, %c0_i32_0, %c0_i32_1 : i32, i32, i32
  }
  func.func @transform_6(%arg0: i32) -> (i32, i32) {
    %c0_i32 = arith.constant 0 : i32
    %c0_i32_0 = arith.constant 0 : i32
    return %arg0, %c0_i32 : i32, i32
  }
}

</mosaic_0001>

<llo_original>
// kernel: tpu_custom_call.1
$region0: #{tpu_custom_call.1}
  #allocation0 [shape = 'u32[]', space=smem, size = 0x4, offset = 0x4, fixed_abs, tag = 'smem constant byte address 0x4 - core index']
  #allocation1 [shape = 'u32[144,128]{1,0:T(1,128)}', space=vmem, size = 0x12000, scoped, tag = 'internal scratch']
  %s0 = inlined_call_operand.vmem [shape: bf16[64,128], index: 0, kind: input, shape index: {}]
  %s1 = inlined_call_operand.vmem [shape: bf16[128,32], index: 1, kind: input, shape index: {}]
  %s2 = inlined_call_operand.hbm [shape: bf16[3,128,128], index: 2, kind: input, shape index: {}]
  %s3 = inlined_call_operand.vmem [shape: f32[8,128], index: 3, kind: input, shape index: {}]
  %s4 = inlined_call_operand.vmem [shape: bf16[3,32,32], index: 4, kind: input, shape index: {}]
  %s5 = inlined_call_operand.hbm [shape: bf16[2,128,128], index: 5, kind: input, shape index: {}]
  %s6 = inlined_call_operand.hbm [shape: f32[64,128], index: 6, kind: output, shape index: {}]
  %s7 = sld [smem:[#allocation0]]
  $region65: #{tpu_custom_call.1} parent=0
    _
  %s9 = ssub.s32 1, %s7
  %s10 = scalar_select 0, %s9, %s7
  $region1: #{tpu_custom_call.1} parent=0
    #allocation2 [shape = 'u8[98304]{0}', space=vmem, size = 0x18000, scoped, tag = 'input window, operand 2, single buffered']
    #allocation3 [shape = 's32[2]{0}', space=sflag, size = 0x8, scoped, tag = 'scoped memory for tpu_custom_call.1']
    #allocation4 [shape = 's32[2]{0}', space=sflag, size = 0x8, scoped, tag = 'scoped memory for tpu_custom_call.1']
    #allocation5 [shape = 'u8[65536]{0}', space=vmem, size = 0x10000, scoped, tag = 'input window, operand 5, single buffered']
    #allocation6 [shape = 's32[1]{0}', space=sflag, size = 0x4, scoped, tag = 'scoped memory for tpu_custom_call.1']
    #allocation7 [shape = 'u8[32768]{0}', space=vmem, size = 0x8000, scoped, tag = 'output window, operand 0']
    %11 = vsyncpa [#allocation3], 0
    %12 = vsyncpa [#allocation6], 0
    %13 = vsyncpa [#allocation4], 0
    %s14 = scalar_lea.sflag [#allocation4], 1
    %15 = vsyncpa %s14, 0
    loop: start=0, step=1, limit=4
    $region2: #{tpu_custom_call.1} parent=1 // loop_pre_header
      _
    $region3: #{tpu_custom_call.1} parent=1 // loop_header
      %s17 = sphi 0, %s21
      %p18 = scmp.ge.s32.totalorder %s17, 4
      %s27 = sphi 0, %s29
      %s30 = sphi 0, %s27
      %s31 = sphi 0, %s30
      %s47 = sphi 0, %s31
      %s51 = sphi 0, %s51
      %s53 = sphi 0, %s51
      %s54 = sphi 0, %s53
      %s68 = sphi 0, %s54
      %s72 = sphi 0, %s72
      %s74 = sphi 0, %s72
      %s75 = sphi 0, %s74
      %s89 = sphi 0, %s75
      %s93 = sphi 0, %s93
      %s95 = sphi 0, %s93
      %s96 = sphi 0, %s95
      %s110 = sphi 0, %s96
      %s114 = sphi 0, %s114
      %s116 = sphi 0, %s114
      %s117 = sphi 0, %s116
      %s131 = sphi 0, %s117
      %s135 = sphi 0, %s135
      %s137 = sphi 0, %s135
      %s138 = sphi 0, %s137
      %s152 = sphi 0, %s138
      %s158 = sphi 0, %s160
      %s161 = sphi 0, %s158
      %s162 = sphi 0, %s161
      %s178 = sphi 0, %s162
    $region4: #{tpu_custom_call.1} parent=1 // loop_header_branch
      %20 = sbr.rel (%p18) target = $region8
    $region5: #{tpu_custom_call.1} parent=1 // loop_body
      %s22 = ssub.s32 %s17, 1
      %s23 = ssub.s32 %s17, 2
      %s24 = sadd.s32 %s17, 1
      %s25 = ssub.s32 %s17, %s24
      %p26 = scmp.eq.s32.totalorder %s25, 0
      %s28 = sadd.s32 %s27, 1
      %s29 = scalar_select %p26, %s27, %s28
      %p32 = pneg %p26
      %p33 = scmp.eq.s32.totalorder %s17, 1
      %p34 = por %p32, %p33
      %p35 = scmp.ne.s32.totalorder %s27, %s30
      %p36 = scmp.eq.s32.totalorder %s17, 0
      %p37 = por %p35, %p36
      %p38 = scmp.ne.s32.totalorder %s27, %s30
      %p39 = scmp.eq.s32.totalorder %s22, 1
      %p40 = por %p38, %p39
      %p41 = scmp.ne.s32.totalorder %s30, %s31
      %p42 = scmp.eq.s32.totalorder %s22, 0
      %p43 = por %p41, %p42
      %p44 = scmp.ne.s32.totalorder %s30, %s31
      %p45 = scmp.eq.s32.totalorder %s23, 1
      %p46 = por %p44, %p45
      %p48 = scmp.ne.s32.totalorder %s31, %s47
      %p49 = scmp.eq.s32.totalorder %s23, 0
      %p50 = por %p48, %p49
      %s52 = sadd.s32 %s51, 1
      %p55 = scmp.eq.s32.totalorder %s17, 1
      %p56 = scmp.ne.s32.totalorder %s51, %s53
      %p57 = scmp.eq.s32.totalorder %s17, 0
      %p58 = por %p56, %p57
      %p59 = scmp.ne.s32.totalorder %s51, %s53
      %p60 = scmp.eq.s32.totalorder %s22, 1
      %p61 = por %p59, %p60
      %p62 = scmp.ne.s32.totalorder %s53, %s54
      %p63 = scmp.eq.s32.totalorder %s22, 0
      %p64 = por %p62, %p63
      %p65 = scmp.ne.s32.totalorder %s53, %s54
      %p66 = scmp.eq.s32.totalorder %s23, 1
      %p67 = por %p65, %p66
      %p69 = scmp.ne.s32.totalorder %s54, %s68
      %p70 = scmp.eq.s32.totalorder %s23, 0
      %p71 = por %p69, %p70
      %s73 = sadd.s32 %s72, 1
      %p76 = scmp.eq.s32.totalorder %s17, 1
      %p77 = scmp.ne.s32.totalorder %s72, %s74
      %p78 = scmp.eq.s32.totalorder %s17, 0
      %p79 = por %p77, %p78
      %p80 = scmp.ne.s32.totalorder %s72, %s74
      %p81 = scmp.eq.s32.totalorder %s22, 1
      %p82 = por %p80, %p81
      %p83 = scmp.ne.s32.totalorder %s74, %s75
      %p84 = scmp.eq.s32.totalorder %s22, 0
      %p85 = por %p83, %p84
      %p86 = scmp.ne.s32.totalorder %s74, %s75
      %p87 = scmp.eq.s32.totalorder %s23, 1
      %p88 = por %p86, %p87
      %p90 = scmp.ne.s32.totalorder %s75, %s89
      %p91 = scmp.eq.s32.totalorder %s23, 0
      %p92 = por %p90, %p91
      %s94 = sadd.s32 %s93, 1
      %p97 = scmp.eq.s32.totalorder %s17, 1
      %p98 = scmp.ne.s32.totalorder %s93, %s95
      %p99 = scmp.eq.s32.totalorder %s17, 0
      %p100 = por %p98, %p99
      %p101 = scmp.ne.s32.totalorder %s93, %s95
      %p102 = scmp.eq.s32.totalorder %s22, 1
      %p103 = por %p101, %p102
      %p104 = scmp.ne.s32.totalorder %s95, %s96
      %p105 = scmp.eq.s32.totalorder %s22, 0
      %p106 = por %p104, %p105
      %p107 = scmp.ne.s32.totalorder %s95, %s96
      %p108 = scmp.eq.s32.totalorder %s23, 1
      %p109 = por %p107, %p108
      %p111 = scmp.ne.s32.totalorder %s96, %s110
      %p112 = scmp.eq.s32.totalorder %s23, 0
      %p113 = por %p111, %p112
      %s115 = sadd.s32 %s114, 1
      %p118 = scmp.eq.s32.totalorder %s17, 1
      %p119 = scmp.ne.s32.totalorder %s114, %s116
      %p120 = scmp.eq.s32.totalorder %s17, 0
      %p121 = por %p119, %p120
      %p122 = scmp.ne.s32.totalorder %s114, %s116
      %p123 = scmp.eq.s32.totalorder %s22, 1
      %p124 = por %p122, %p123
      %p125 = scmp.ne.s32.totalorder %s116, %s117
      %p126 = scmp.eq.s32.totalorder %s22, 0
      %p127 = por %p125, %p126
      %p128 = scmp.ne.s32.totalorder %s116, %s117
      %p129 = scmp.eq.s32.totalorder %s23, 1
      %p130 = por %p128, %p129
      %p132 = scmp.ne.s32.totalorder %s117, %s131
      %p133 = scmp.eq.s32.totalorder %s23, 0
      %p134 = por %p132, %p133
      %s136 = sadd.s32 %s135, 1
      %p139 = scmp.eq.s32.totalorder %s17, 1
      %p140 = scmp.ne.s32.totalorder %s135, %s137
      %p141 = scmp.eq.s32.totalorder %s17, 0
      %p142 = por %p140, %p141
      %p143 = scmp.ne.s32.totalorder %s135, %s137
      %p144 = scmp.eq.s32.totalorder %s22, 1
      %p145 = por %p143, %p144
      %p146 = scmp.ne.s32.totalorder %s137, %s138
      %p147 = scmp.eq.s32.totalorder %s22, 0
      %p148 = por %p146, %p147
      %p149 = scmp.ne.s32.totalorder %s137, %s138
      %p150 = scmp.eq.s32.totalorder %s23, 1
      %p151 = por %p149, %p150
      %p153 = scmp.ne.s32.totalorder %s138, %s152
      %p154 = scmp.eq.s32.totalorder %s23, 0
      %p155 = por %p153, %p154
      %s156 = ssub.s32 %s17, %s24
      %p157 = scmp.eq.s32.totalorder %s156, 0
      %s159 = sadd.s32 %s158, 1
      %s160 = scalar_select %p157, %s158, %s159
      %p163 = pneg %p157
      %p164 = scmp.eq.s32.totalorder %s17, 1
      %p165 = por %p163, %p164
      %p166 = scmp.ne.s32.totalorder %s158, %s161
      %p167 = scmp.eq.s32.totalorder %s17, 0
      %p168 = por %p166, %p167
      %p169 = scmp.ne.s32.totalorder %s158, %s161
      %p170 = scmp.eq.s32.totalorder %s22, 1
      %p171 = por %p169, %p170
      %p172 = scmp.ne.s32.totalorder %s161, %s162
      %p173 = scmp.eq.s32.totalorder %s22, 0
      %p174 = por %p172, %p173
      %p175 = scmp.ne.s32.totalorder %s161, %s162
      %p176 = scmp.eq.s32.totalorder %s23, 1
      %p177 = por %p175, %p176
      %p179 = scmp.ne.s32.totalorder %s162, %s178
      %p180 = scmp.eq.s32.totalorder %s23, 0
      %p181 = por %p179, %p180
      %p182 = scmp.le.s32.totalorder 1, %s17
      %p183 = scmp.lt.s32.totalorder %s17, 3
      %p184 = pnand %p182, %p183
      %p185 = pneg %p184
      // Predicated region
      $region9: #{tpu_custom_call.1} parent=5 // pred_check
        _
      $region10: #{tpu_custom_call.1} parent=5 // pred_check_branch
        %187 = sbr.rel (%p184) target = $region12
      $region11: #{tpu_custom_call.1} parent=5 // pred_region
        %s188 = ssub.s32 %s17, 1
        // Predicated region
        $region13: #{tpu_custom_call.1} parent=11 // pred_check
          %p189 = pneg %p64
        $region14: #{tpu_custom_call.1} parent=11 // pred_check_branch
          %191 = sbr.rel (%p189) target = $region16
        $region15: #{tpu_custom_call.1} parent=11 // pred_region
          _
        $region16: #{tpu_custom_call.1} parent=11 // pred_fallthru
          _
        // Predicated region
        $region17: #{tpu_custom_call.1} parent=11 // pred_check
          %p192 = pneg %p85
        $region18: #{tpu_custom_call.1} parent=11 // pred_check_branch
          %194 = sbr.rel (%p192) target = $region20
        $region19: #{tpu_custom_call.1} parent=11 // pred_region
          %s196 = ssub.s32 3072, 3072
          %197 = vsyncadd [#allocation3], %s196
          %s198 = sshll.u32 [#allocation2], 4
          %s199 = int_to_ptr.vmem [resolvable:$true] %s198
          %204 = dma.hbm_to_vmem [thread:$0]  %s2, 3072, %s199, [#allocation3], 64, 64, 4
        $region20: #{tpu_custom_call.1} parent=11 // pred_fallthru
          _
        // Predicated region
        $region21: #{tpu_custom_call.1} parent=11 // pred_check
          %p205 = pneg %p106
        $region22: #{tpu_custom_call.1} parent=11 // pred_check_branch
          %207 = sbr.rel (%p205) target = $region24
        $region23: #{tpu_custom_call.1} parent=11 // pred_region
          _
        $region24: #{tpu_custom_call.1} parent=11 // pred_fallthru
          _
        // Predicated region
        $region25: #{tpu_custom_call.1} parent=11 // pred_check
          %p208 = pneg %p127
        $region26: #{tpu_custom_call.1} parent=11 // pred_check_branch
          %210 = sbr.rel (%p208) target = $region28
        $region27: #{tpu_custom_call.1} parent=11 // pred_region
          _
        $region28: #{tpu_custom_call.1} parent=11 // pred_fallthru
          _
        // Predicated region
        $region29: #{tpu_custom_call.1} parent=11 // pred_check
          %p211 = pneg %p148
        $region30: #{tpu_custom_call.1} parent=11 // pred_check_branch
          %213 = sbr.rel (%p211) target = $region32
        $region31: #{tpu_custom_call.1} parent=11 // pred_region
          %s215 = ssub.s32 2048, 2048
          %216 = vsyncadd [#allocation6], %s215
          %s217 = sshll.u32 [#allocation5], 4
          %s218 = int_to_ptr.vmem [resolvable:$true] %s217
          %223 = dma.hbm_to_vmem [thread:$0]  %s5, 2048, %s218, [#allocation6], 64, 64, 4
        $region32: #{tpu_custom_call.1} parent=11 // pred_fallthru
          _
      $region12: #{tpu_custom_call.1} parent=5 // pred_fallthru
        _
      %p224 = scmp.lt.s32.totalorder %s17, 2
      // Predicated region
      $region33: #{tpu_custom_call.1} parent=5 // pred_check
        %p225 = pneg %p224
      $region34: #{tpu_custom_call.1} parent=5 // pred_check_branch
        %227 = sbr.rel (%p225) target = $region36
      $region35: #{tpu_custom_call.1} parent=5 // pred_region
        // Predicated region
        $region37: #{tpu_custom_call.1} parent=35 // pred_check
          %p228 = pneg %p37
        $region38: #{tpu_custom_call.1} parent=35 // pred_check_branch
          %230 = sbr.rel (%p228) target = $region40
        $region39: #{tpu_custom_call.1} parent=35 // pred_region
          %s231 = smul.u32 4, %s17
          %p232 = scmp.lt.s32.totalorder %s231, 7
          %s233 = scalar_select %p232, %s231, 7
          %s234 = smul.addr %s233, 4
          %s235 = scalar_lea.vmem %s0, %s234
          %s236 = smul.u32 4, %s17
        $region40: #{tpu_custom_call.1} parent=35 // pred_fallthru
          _
      $region36: #{tpu_custom_call.1} parent=5 // pred_fallthru
        _
      %p237 = scmp.le.s32.totalorder 1, %s17
      %p238 = scmp.lt.s32.totalorder %s17, 3
      %p239 = pnand %p237, %p238
      %p240 = pneg %p239
      // Predicated region
      $region41: #{tpu_custom_call.1} parent=5 // pred_check
        _
      $region42: #{tpu_custom_call.1} parent=5 // pred_check_branch
        %242 = sbr.rel (%p239) target = $region44
      $region43: #{tpu_custom_call.1} parent=5 // pred_region
        %s243 = ssub.s32 %s17, 1
        // Predicated region
        $region45: #{tpu_custom_call.1} parent=43 // pred_check
          %p244 = pneg %p85
        $region46: #{tpu_custom_call.1} parent=43 // pred_check_branch
          %246 = sbr.rel (%p244) target = $region48
        $region47: #{tpu_custom_call.1} parent=43 // pred_region
          %247 = dma.done [#allocation3], 3072
        $region48: #{tpu_custom_call.1} parent=43 // pred_fallthru
          _
        // Predicated region
        $region49: #{tpu_custom_call.1} parent=43 // pred_check
          %p248 = pneg %p148
        $region50: #{tpu_custom_call.1} parent=43 // pred_check_branch
          %250 = sbr.rel (%p248) target = $region52
        $region51: #{tpu_custom_call.1} parent=43 // pred_region
          %251 = dma.done [#allocation6], 2048
        $region52: #{tpu_custom_call.1} parent=43 // pred_fallthru
          _
        %s252 = smul.u32 4, %s22
        %p253 = scmp.lt.s32.totalorder %s252, 7
        %s254 = scalar_select %p253, %s252, 7
        %s255 = smul.addr %s254, 4
        %s256 = scalar_lea.vmem %s0, %s255
        %p257 = pneg %p43
        %p258 = pneg %p40
        %p259 = pneg %p64
        %p260 = pneg %p61
        %p261 = pneg %p85
        %p262 = pneg %p82
        %p263 = pneg %p106
        %p264 = pneg %p103
        %p265 = pneg %p127
        %p266 = pneg %p124
        %p267 = pneg %p148
        %p268 = pneg %p145
        %p269 = pneg %p174
        %p270 = pneg %p171
        %s271 = sand.u32 %s161, 1
        %s272 = scalar_lea.sflag [#allocation4], %s271
        %s273 = sand.u32 %s161, 1
        %s274 = smul.addr %s273, 32
        %s275 = scalar_lea.vmem [#allocation7], %s274
        %s276 = smul.u32 4, %s22
        %p277 = scmp.lt.s32.totalorder %s276, 7
        %s278 = scalar_select %p277, %s276, 7
        %s279 = smul.addr %s278, 4
        %s280 = scalar_lea.vmem %s0, %s279
        %s281 = smul.u32 4, %s22
        %s282 = smul.u32 4, %s22
        %v284 = vld [vmem:[%s1] sm:$0xf]
        %v285 = vld [vmem:[%s1 + $0x4] sm:$0xf]
        %v286 = vld [vmem:[%s1 + $0x8] sm:$0xf]
        %v287 = vld [vmem:[%s1 + $0xc] sm:$0xf]
        %v288 = vld [vmem:[%s1 + $0x10] sm:$0xf]
        %v289 = vld [vmem:[%s1 + $0x14] sm:$0xf]
        %v290 = vld [vmem:[%s1 + $0x18] sm:$0xf]
        %v291 = vld [vmem:[%s1 + $0x1c] sm:$0xf]
        %v292 = vld [vmem:[%s1 + $0x20] sm:$0xf]
        %v293 = vld [vmem:[%s1 + $0x24] sm:$0xf]
        %v294 = vld [vmem:[%s1 + $0x28] sm:$0xf]
        %v295 = vld [vmem:[%s1 + $0x2c] sm:$0xf]
        %v296 = vld [vmem:[%s1 + $0x30] sm:$0xf]
        %v297 = vld [vmem:[%s1 + $0x34] sm:$0xf]
        %v298 = vld [vmem:[%s1 + $0x38] sm:$0xf]
        %v299 = vld [vmem:[%s1 + $0x3c] sm:$0xf]
        %v300 = vld [vmem:[%s280] sm:$0xf]
        %v301 = vld [vmem:[%s280 + $0x4] sm:$0xf]
        %v302 = vld [vmem:[%s280 + $0x8] sm:$0xf]
        %v303 = vld [vmem:[%s280 + $0xc] sm:$0xf]
        %v320 = vunpack.c.l.b16 %v284
        %v321 = vunpack.c.l.b16 %v285
        %v322 = vunpack.c.l.b16 %v286
        %v323 = vunpack.c.l.b16 %v287
        %v324 = vunpack.c.l.b16 %v288
        %v325 = vunpack.c.l.b16 %v289
        %v326 = vunpack.c.l.b16 %v290
        %v327 = vunpack.c.l.b16 %v291
        %v328 = vunpack.c.l.b16 %v292
        %v329 = vunpack.c.l.b16 %v293
        %v330 = vunpack.c.l.b16 %v294
        %v331 = vunpack.c.l.b16 %v295
        %v332 = vunpack.c.l.b16 %v296
        %v333 = vunpack.c.l.b16 %v297
        %v334 = vunpack.c.l.b16 %v298
        %v335 = vunpack.c.l.b16 %v299
        %v336 = vpack.c.b16 %v321, %v320
        %v337 = vpack.c.b16 %v323, %v322
        %v338 = vpack.c.b16 %v325, %v324
        %v339 = vpack.c.b16 %v327, %v326
        %v340 = vpack.c.b16 %v329, %v328
        %v341 = vpack.c.b16 %v331, %v330
        %v342 = vpack.c.b16 %v333, %v332
        %v343 = vpack.c.b16 %v335, %v334
        %v348 = vunpack.c.l.b16 %v300
        %v349 = vunpack.c.l.b16 %v301
        %v350 = vunpack.c.l.b16 %v302
        %v351 = vunpack.c.l.b16 %v303
        %v352 = vpack.c.b16 %v349, %v348
        %v353 = vpack.c.b16 %v351, %v350
        %vm356 = vcmask 261120
        %v358 = vsel %vm356, %v336, 0
        %v361 = vsel %vm356, %v337, 0
        %v364 = vsel %vm356, %v338, 0
        %v367 = vsel %vm356, %v339, 0
        %v370 = vsel %vm356, %v340, 0
        %v373 = vsel %vm356, %v341, 0
        %v376 = vsel %vm356, %v342, 0
        %v379 = vsel %vm356, %v343, 0
        %381 = vmatprep.subr.bf16.mxu0 0
        %382 = vmatpush1.bf16.msra.mxu0 %v352
        %383 = vmatprep.subr.bf16.mxu0 0
        %384 = vmatpush1.bf16.msra.mxu0 %v353
        %385 = vmatprep.subr.bf16.mxu0 0
        %386 = vmatpush1.bf16.msra.mxu0 0
        %387 = vmatprep.subr.bf16.mxu0 0
        %388 = vmatpush1.bf16.msra.mxu0 0
        %389 = vmatprep.subr.bf16.mxu0 0
        %390 = vmatpush1.bf16.msra.mxu0 0
        %391 = vmatprep.subr.bf16.mxu0 0
        %392 = vmatpush1.bf16.msra.mxu0 0
        %393 = vmatprep.subr.bf16.mxu0 0
        %394 = vmatpush1.bf16.msra.mxu0 0
        %395 = vmatprep.subr.bf16.mxu0 0
        %396 = vmatpush1.bf16.msra.mxu0 0
        %397 = vmatprep.subr.bf16.mxu0 0
        %398 = vmatpush1.bf16.msra.mxu0 0
        %399 = vmatprep.subr.bf16.mxu0 0
        %400 = vmatpush1.bf16.msra.mxu0 0
        %401 = vmatprep.subr.bf16.mxu0 0
        %402 = vmatpush1.bf16.msra.mxu0 0
        %403 = vmatprep.subr.bf16.mxu0 0
        %404 = vmatpush1.bf16.msra.mxu0 0
        %405 = vmatprep.subr.bf16.mxu0 0
        %406 = vmatpush1.bf16.msra.mxu0 0
        %407 = vmatprep.subr.bf16.mxu0 0
        %408 = vmatpush1.bf16.msra.mxu0 0
        %409 = vmatprep.subr.bf16.mxu0 0
        %410 = vmatpush1.bf16.msra.mxu0 0
        %411 = vmatprep.subr.bf16.mxu0 0
        %412 = vmatpush1.bf16.msra.mxu0 0
        %413 = vmatprep.mubr.bf16.mxu0 0
        %414 = vmatmul.mubr.bf16.gmra.mrb[0].mxu0 %v358
        %v415 = vpop.f32.mrb[0].mxu0
        %v416 = vadd.f32 0.0, %v415
        %v417 = vpop.f32.mrb[0].mxu0
        %v418 = vpop.f32.mrb[0].mxu0
        %v419 = vadd.f32 0.0, %v418
        %v420 = vpop.f32.mrb[0].mxu0
        %421 = vmatprep.mubr.bf16.mxu0 0
        %422 = vmatmul.mubr.bf16.gmra.mrb[0].mxu0 %v361
        %v423 = vpop.f32.mrb[0].mxu0
        %v424 = vadd.f32 0.0, %v423
        %v425 = vpop.f32.mrb[0].mxu0
        %v426 = vpop.f32.mrb[0].mxu0
        %v427 = vadd.f32 0.0, %v426
        %v428 = vpop.f32.mrb[0].mxu0
        %429 = vmatprep.mubr.bf16.mxu0 0
        %430 = vmatmul.mubr.bf16.gmra.mrb[0].mxu0 %v364
        %v431 = vpop.f32.mrb[0].mxu0
        %v432 = vadd.f32 0.0, %v431
        %v433 = vpop.f32.mrb[0].mxu0
        %v434 = vpop.f32.mrb[0].mxu0
        %v435 = vadd.f32 0.0, %v434
        %v436 = vpop.f32.mrb[0].mxu0
        %437 = vmatprep.mubr.bf16.mxu0 0
        %438 = vmatmul.mubr.bf16.gmra.mrb[0].mxu0 %v367
        %v439 = vpop.f32.mrb[0].mxu0
        %v440 = vadd.f32 0.0, %v439
        %v441 = vpop.f32.mrb[0].mxu0
        %v442 = vpop.f32.mrb[0].mxu0
        %v443 = vadd.f32 0.0, %v442
        %v444 = vpop.f32.mrb[0].mxu0
        %445 = vmatprep.mubr.bf16.mxu0 0
        %446 = vmatmul.mubr.bf16.gmra.mrb[0].mxu0 %v370
        %v447 = vpop.f32.mrb[0].mxu0
        %v448 = vadd.f32 0.0, %v447
        %v449 = vpop.f32.mrb[0].mxu0
        %v450 = vpop.f32.mrb[0].mxu0
        %v451 = vadd.f32 0.0, %v450
        %v452 = vpop.f32.mrb[0].mxu0
        %453 = vmatprep.mubr.bf16.mxu0 0
        %454 = vmatmul.mubr.bf16.gmra.mrb[0].mxu0 %v373
        %v455 = vpop.f32.mrb[0].mxu0
        %v456 = vadd.f32 0.0, %v455
        %v457 = vpop.f32.mrb[0].mxu0
        %v458 = vpop.f32.mrb[0].mxu0
        %v459 = vadd.f32 0.0, %v458
        %v460 = vpop.f32.mrb[0].mxu0
        %461 = vmatprep.mubr.bf16.mxu0 0
        %462 = vmatmul.mubr.bf16.gmra.mrb[0].mxu0 %v376
        %v463 = vpop.f32.mrb[0].mxu0
        %v464 = vadd.f32 0.0, %v463
        %v465 = vpop.f32.mrb[0].mxu0
        %v466 = vpop.f32.mrb[0].mxu0
        %v467 = vadd.f32 0.0, %v466
        %v468 = vpop.f32.mrb[0].mxu0
        %469 = vmatprep.mubr.bf16.mxu0 0
        %470 = vmatmul.mubr.bf16.gmra.mrb[0].mxu0 %v379
        %v471 = vpop.f32.mrb[0].mxu0
        %v472 = vadd.f32 0.0, %v471
        %v473 = vpop.f32.mrb[0].mxu0
        %v474 = vpop.f32.mrb[0].mxu0
        %v475 = vadd.f32 0.0, %v474
        %v476 = vpop.f32.mrb[0].mxu0
        %477 = vdwg.mxu0
        %v478 = vpack.c.bf16 %v419, %v416
        %v479 = vpack.c.bf16 %v427, %v424
        %v480 = vld [vmem:[#allocation2] sm:$0xf]
        %v481 = vld [vmem:[#allocation2 + $0x4] sm:$0xf]
        %v482 = vld [vmem:[#allocation2 + $0x8] sm:$0xf]
        %v483 = vld [vmem:[#allocation2 + $0xc] sm:$0xf]
        %v484 = vld [vmem:[#allocation2 + $0x10] sm:$0xf]
        %v485 = vld [vmem:[#allocation2 + $0x14] sm:$0xf]
        %v486 = vld [vmem:[#allocation2 + $0x18] sm:$0xf]
        %v487 = vld [vmem:[#allocation2 + $0x1c] sm:$0xf]
        %v488 = vld [vmem:[#allocation2 + $0x20] sm:$0xf]
        %v489 = vld [vmem:[#allocation2 + $0x24] sm:$0xf]
        %v490 = vld [vmem:[#allocation2 + $0x28] sm:$0xf]
        %v491 = vld [vmem:[#allocation2 + $0x2c] sm:$0xf]
        %v492 = vld [vmem:[#allocation2 + $0x30] sm:$0xf]
        %v493 = vld [vmem:[#allocation2 + $0x34] sm:$0xf]
        %v494 = vld [vmem:[#allocation2 + $0x38] sm:$0xf]
        %v495 = vld [vmem:[#allocation2 + $0x3c] sm:$0xf]
        %v496 = vpack.c.bf16 %v435, %v432
        %v497 = vpack.c.bf16 %v443, %v440
        %s498 = scalar_lea.vmem [#allocation2], 64
        %v499 = vld [vmem:[%s498] sm:$0xf]
        %v500 = vld [vmem:[%s498 + $0x4] sm:$0xf]
        %v501 = vld [vmem:[%s498 + $0x8] sm:$0xf]
        %v502 = vld [vmem:[%s498 + $0xc] sm:$0xf]
        %v503 = vld [vmem:[%s498 + $0x10] sm:$0xf]
        %v504 = vld [vmem:[%s498 + $0x14] sm:$0xf]
        %v505 = vld [vmem:[%s498 + $0x18] sm:$0xf]
        %v506 = vld [vmem:[%s498 + $0x1c] sm:$0xf]
        %v507 = vld [vmem:[%s498 + $0x20] sm:$0xf]
        %v508 = vld [vmem:[%s498 + $0x24] sm:$0xf]
        %v509 = vld [vmem:[%s498 + $0x28] sm:$0xf]
        %v510 = vld [vmem:[%s498 + $0x2c] sm:$0xf]
        %v511 = vld [vmem:[%s498 + $0x30] sm:$0xf]
        %v512 = vld [vmem:[%s498 + $0x34] sm:$0xf]
        %v513 = vld [vmem:[%s498 + $0x38] sm:$0xf]
        %v514 = vld [vmem:[%s498 + $0x3c] sm:$0xf]
        %v531 = vunpack.c.l.b16 %v499
        %v532 = vunpack.c.l.b16 %v500
        %v533 = vunpack.c.l.b16 %v501
        %v534 = vunpack.c.l.b16 %v502
        %v535 = vunpack.c.l.b16 %v503
        %v536 = vunpack.c.l.b16 %v504
        %v537 = vunpack.c.l.b16 %v505
        %v538 = vunpack.c.l.b16 %v506
        %v539 = vunpack.c.l.b16 %v507
        %v540 = vunpack.c.l.b16 %v508
        %v541 = vunpack.c.l.b16 %v509
        %v542 = vunpack.c.l.b16 %v510
        %v543 = vunpack.c.l.b16 %v511
        %v544 = vunpack.c.l.b16 %v512
        %v545 = vunpack.c.l.b16 %v513
        %v546 = vunpack.c.l.b16 %v514
        %v547 = vpack.c.b16 %v532, %v531
        %v548 = vpack.c.b16 %v534, %v533
        %v549 = vpack.c.b16 %v536, %v535
        %v550 = vpack.c.b16 %v538, %v537
        %v551 = vpack.c.b16 %v540, %v539
        %v552 = vpack.c.b16 %v542, %v541
        %v553 = vpack.c.b16 %v544, %v543
        %v554 = vpack.c.b16 %v546, %v545
        %563 = vmatprep.subr.bf16.mxu0 0
        %564 = vmatpush1.bf16.msra.mxu0 %v547
        %565 = vmatprep.subr.bf16.mxu0 0
        %566 = vmatpush1.bf16.msra.mxu0 %v548
        %567 = vmatprep.subr.bf16.mxu0 0
        %568 = vmatpush1.bf16.msra.mxu0 %v549
        %569 = vmatprep.subr.bf16.mxu0 0
        %570 = vmatpush1.bf16.msra.mxu0 %v550
        %571 = vmatprep.subr.bf16.mxu0 0
        %572 = vmatpush1.bf16.msra.mxu0 %v551
        %573 = vmatprep.subr.bf16.mxu0 0
        %574 = vmatpush1.bf16.msra.mxu0 %v552
        %575 = vmatprep.subr.bf16.mxu0 0
        %576 = vmatpush1.bf16.msra.mxu0 %v553
        %577 = vmatprep.subr.bf16.mxu0 0
        %578 = vmatpush1.bf16.msra.mxu0 %v554
        %579 = vmatprep.subr.bf16.mxu0 0
        %580 = vmatpush1.bf16.msra.mxu0 0
        %581 = vmatprep.subr.bf16.mxu0 0
        %582 = vmatpush1.bf16.msra.mxu0 0
        %583 = vmatprep.subr.bf16.mxu0 0
        %584 = vmatpush1.bf16.msra.mxu0 0
        %585 = vmatprep.subr.bf16.mxu0 0
        %586 = vmatpush1.bf16.msra.mxu0 0
        %587 = vmatprep.subr.bf16.mxu0 0
        %588 = vmatpush1.bf16.msra.mxu0 0
        %589 = vmatprep.subr.bf16.mxu0 0
        %590 = vmatpush1.bf16.msra.mxu0 0
        %591 = vmatprep.subr.bf16.mxu0 0
        %592 = vmatpush1.bf16.msra.mxu0 0
        %593 = vmatprep.subr.bf16.mxu0 0
        %594 = vmatpush1.bf16.msra.mxu0 0
        %595 = vmatprep.mubr.bf16.mxu0 0
        %596 = vmatmul.mubr.bf16.gmra.mrb[0].mxu0 %v496
        %v597 = vpop.f32.mrb[0].mxu0
        %v598 = vadd.f32 0.0, %v597
        %v599 = vpop.f32.mrb[0].mxu0
        %v600 = vpop.f32.mrb[0].mxu0
        %v601 = vadd.f32 0.0, %v600
        %v602 = vpop.f32.mrb[0].mxu0
        %603 = vmatprep.mubr.bf16.mxu0 0
        %604 = vmatmul.mubr.bf16.gmra.mrb[0].mxu0 %v497
        %v605 = vpop.f32.mrb[0].mxu0
        %v606 = vadd.f32 0.0, %v605
        %v607 = vpop.f32.mrb[0].mxu0
        %v608 = vpop.f32.mrb[0].mxu0
        %v609 = vadd.f32 0.0, %v608
        %v610 = vpop.f32.mrb[0].mxu0
        %611 = vdwg.mxu0
        %v628 = vunpack.c.l.b16 %v480
        %v629 = vunpack.c.l.b16 %v481
        %v630 = vunpack.c.l.b16 %v482
        %v631 = vunpack.c.l.b16 %v483
        %v632 = vunpack.c.l.b16 %v484
        %v633 = vunpack.c.l.b16 %v485
        %v634 = vunpack.c.l.b16 %v486
        %v635 = vunpack.c.l.b16 %v487
        %v636 = vunpack.c.l.b16 %v488
        %v637 = vunpack.c.l.b16 %v489
        %v638 = vunpack.c.l.b16 %v490
        %v639 = vunpack.c.l.b16 %v491
        %v640 = vunpack.c.l.b16 %v492
        %v641 = vunpack.c.l.b16 %v493
        %v642 = vunpack.c.l.b16 %v494
        %v643 = vunpack.c.l.b16 %v495
        %v644 = vpack.c.b16 %v629, %v628
        %v645 = vpack.c.b16 %v631, %v630
        %v646 = vpack.c.b16 %v633, %v632
        %v647 = vpack.c.b16 %v635, %v634
        %v648 = vpack.c.b16 %v637, %v636
        %v649 = vpack.c.b16 %v639, %v638
        %v650 = vpack.c.b16 %v641, %v640
        %v651 = vpack.c.b16 %v643, %v642
        %660 = vmatprep.subr.bf16.mxu0 0
        %661 = vmatpush1.bf16.msra.mxu0 %v644
        %662 = vmatprep.subr.bf16.mxu0 0
        %663 = vmatpush1.bf16.msra.mxu0 %v645
        %664 = vmatprep.subr.bf16.mxu0 0
        %665 = vmatpush1.bf16.msra.mxu0 %v646
        %666 = vmatprep.subr.bf16.mxu0 0
        %667 = vmatpush1.bf16.msra.mxu0 %v647
        %668 = vmatprep.subr.bf16.mxu0 0
        %669 = vmatpush1.bf16.msra.mxu0 %v648
        %670 = vmatprep.subr.bf16.mxu0 0
        %671 = vmatpush1.bf16.msra.mxu0 %v649
        %672 = vmatprep.subr.bf16.mxu0 0
        %673 = vmatpush1.bf16.msra.mxu0 %v650
        %674 = vmatprep.subr.bf16.mxu0 0
        %675 = vmatpush1.bf16.msra.mxu0 %v651
        %676 = vmatprep.subr.bf16.mxu0 0
        %677 = vmatpush1.bf16.msra.mxu0 0
        %678 = vmatprep.subr.bf16.mxu0 0
        %679 = vmatpush1.bf16.msra.mxu0 0
        %680 = vmatprep.subr.bf16.mxu0 0
        %681 = vmatpush1.bf16.msra.mxu0 0
        %682 = vmatprep.subr.bf16.mxu0 0
        %683 = vmatpush1.bf16.msra.mxu0 0
        %684 = vmatprep.subr.bf16.mxu0 0
        %685 = vmatpush1.bf16.msra.mxu0 0
        %686 = vmatprep.subr.bf16.mxu0 0
        %687 = vmatpush1.bf16.msra.mxu0 0
        %688 = vmatprep.subr.bf16.mxu0 0
        %689 = vmatpush1.bf16.msra.mxu0 0
        %690 = vmatprep.subr.bf16.mxu0 0
        %691 = vmatpush1.bf16.msra.mxu0 0
        %692 = vmatprep.mubr.bf16.mxu0 0
        %693 = vmatmul.mubr.bf16.gmra.mrb[0].mxu0 %v478
        %v694 = vpop.f32.mrb[0].mxu0
        %v695 = vadd.f32 %v598, %v694
        %v696 = vpop.f32.mrb[0].mxu0
        %v697 = vpop.f32.mrb[0].mxu0
        %v698 = vadd.f32 %v601, %v697
        %v699 = vpop.f32.mrb[0].mxu0
        %700 = vmatprep.mubr.bf16.mxu0 0
        %701 = vmatmul.mubr.bf16.gmra.mrb[0].mxu0 %v479
        %v702 = vpop.f32.mrb[0].mxu0
        %v703 = vadd.f32 %v606, %v702
        %v704 = vpop.f32.mrb[0].mxu0
        %v705 = vpop.f32.mrb[0].mxu0
        %v706 = vadd.f32 %v609, %v705
        %v707 = vpop.f32.mrb[0].mxu0
        %708 = vdwg.mxu0
        %v709 = vpack.c.bf16 %v451, %v448
        %v710 = vpack.c.bf16 %v459, %v456
        %s711 = scalar_lea.vmem [#allocation2], 128
        %v712 = vld [vmem:[%s711] sm:$0xf]
        %v713 = vld [vmem:[%s711 + $0x4] sm:$0xf]
        %v714 = vld [vmem:[%s711 + $0x8] sm:$0xf]
        %v715 = vld [vmem:[%s711 + $0xc] sm:$0xf]
        %v716 = vld [vmem:[%s711 + $0x10] sm:$0xf]
        %v717 = vld [vmem:[%s711 + $0x14] sm:$0xf]
        %v718 = vld [vmem:[%s711 + $0x18] sm:$0xf]
        %v719 = vld [vmem:[%s711 + $0x1c] sm:$0xf]
        %v720 = vld [vmem:[%s711 + $0x20] sm:$0xf]
        %v721 = vld [vmem:[%s711 + $0x24] sm:$0xf]
        %v722 = vld [vmem:[%s711 + $0x28] sm:$0xf]
        %v723 = vld [vmem:[%s711 + $0x2c] sm:$0xf]
        %v724 = vld [vmem:[%s711 + $0x30] sm:$0xf]
        %v725 = vld [vmem:[%s711 + $0x34] sm:$0xf]
        %v726 = vld [vmem:[%s711 + $0x38] sm:$0xf]
        %v727 = vld [vmem:[%s711 + $0x3c] sm:$0xf]
        %v744 = vunpack.c.l.b16 %v712
        %v745 = vunpack.c.l.b16 %v713
        %v746 = vunpack.c.l.b16 %v714
        %v747 = vunpack.c.l.b16 %v715
        %v748 = vunpack.c.l.b16 %v716
        %v749 = vunpack.c.l.b16 %v717
        %v750 = vunpack.c.l.b16 %v718
        %v751 = vunpack.c.l.b16 %v719
        %v752 = vunpack.c.l.b16 %v720
        %v753 = vunpack.c.l.b16 %v721
        %v754 = vunpack.c.l.b16 %v722
        %v755 = vunpack.c.l.b16 %v723
        %v756 = vunpack.c.l.b16 %v724
        %v757 = vunpack.c.l.b16 %v725
        %v758 = vunpack.c.l.b16 %v726
        %v759 = vunpack.c.l.b16 %v727
        %v760 = vpack.c.b16 %v745, %v744
        %v761 = vpack.c.b16 %v747, %v746
        %v762 = vpack.c.b16 %v749, %v748
        %v763 = vpack.c.b16 %v751, %v750
        %v764 = vpack.c.b16 %v753, %v752
        %v765 = vpack.c.b16 %v755, %v754
        %v766 = vpack.c.b16 %v757, %v756
        %v767 = vpack.c.b16 %v759, %v758
        %776 = vmatprep.subr.bf16.mxu0 0
        %777 = vmatpush1.bf16.msra.mxu0 %v760
        %778 = vmatprep.subr.bf16.mxu0 0
        %779 = vmatpush1.bf16.msra.mxu0 %v761
        %780 = vmatprep.subr.bf16.mxu0 0
        %781 = vmatpush1.bf16.msra.mxu0 %v762
        %782 = vmatprep.subr.bf16.mxu0 0
        %783 = vmatpush1.bf16.msra.mxu0 %v763
        %784 = vmatprep.subr.bf16.mxu0 0
        %785 = vmatpush1.bf16.msra.mxu0 %v764
        %786 = vmatprep.subr.bf16.mxu0 0
        %787 = vmatpush1.bf16.msra.mxu0 %v765
        %788 = vmatprep.subr.bf16.mxu0 0
        %789 = vmatpush1.bf16.msra.mxu0 %v766
        %790 = vmatprep.subr.bf16.mxu0 0
        %791 = vmatpush1.bf16.msra.mxu0 %v767
        %792 = vmatprep.subr.bf16.mxu0 0
        %793 = vmatpush1.bf16.msra.mxu0 0
        %794 = vmatprep.subr.bf16.mxu0 0
        %795 = vmatpush1.bf16.msra.mxu0 0
        %796 = vmatprep.subr.bf16.mxu0 0
        %797 = vmatpush1.bf16.msra.mxu0 0
        %798 = vmatprep.subr.bf16.mxu0 0
        %799 = vmatpush1.bf16.msra.mxu0 0
        %800 = vmatprep.subr.bf16.mxu0 0
        %801 = vmatpush1.bf16.msra.mxu0 0
        %802 = vmatprep.subr.bf16.mxu0 0
        %803 = vmatpush1.bf16.msra.mxu0 0
        %804 = vmatprep.subr.bf16.mxu0 0
        %805 = vmatpush1.bf16.msra.mxu0 0
        %806 = vmatprep.subr.bf16.mxu0 0
        %807 = vmatpush1.bf16.msra.mxu0 0
        %808 = vmatprep.mubr.bf16.mxu0 0
        %809 = vmatmul.mubr.bf16.gmra.mrb[0].mxu0 %v709
        %v810 = vpop.f32.mrb[0].mxu0
        %v811 = vadd.f32 0.0, %v810
        %v812 = vpop.f32.mrb[0].mxu0
        %v813 = vpop.f32.mrb[0].mxu0
        %v814 = vadd.f32 0.0, %v813
        %v815 = vpop.f32.mrb[0].mxu0
        %816 = vmatprep.mubr.bf16.mxu0 0
        %817 = vmatmul.mubr.bf16.gmra.mrb[0].mxu0 %v710
        %v818 = vpop.f32.mrb[0].mxu0
        %v819 = vadd.f32 0.0, %v818
        %v820 = vpop.f32.mrb[0].mxu0
        %v821 = vpop.f32.mrb[0].mxu0
        %v822 = vadd.f32 0.0, %v821
        %v823 = vpop.f32.mrb[0].mxu0
        %824 = vdwg.mxu0
        %v825 = vadd.f32 %v695, %v811
        %v826 = vadd.f32 %v698, %v814
        %v827 = vadd.f32 %v703, %v819
        %v828 = vadd.f32 %v706, %v822
        %v829 = vld [vmem:[%s3] sm:$0xff]
        %v830 = vadd.f32 %v825, %v829
        %v831 = vadd.f32 %v826, %v829
        %v832 = vadd.f32 %v827, %v829
        %v833 = vadd.f32 %v828, %v829
        %v834 = vmax.f32 %v830, 0.0
        %v835 = vmax.f32 %v831, 0.0
        %v836 = vmax.f32 %v832, 0.0
        %v837 = vmax.f32 %v833, 0.0
        %v838 = vpack.c.bf16 %v835, %v834
        %v839 = vpack.c.bf16 %v837, %v836
        %v840 = vld [vmem:[#allocation5] sm:$0xf]
        %v841 = vld [vmem:[#allocation5 + $0x4] sm:$0xf]
        %v842 = vld [vmem:[#allocation5 + $0x8] sm:$0xf]
        %v843 = vld [vmem:[#allocation5 + $0xc] sm:$0xf]
        %v844 = vld [vmem:[#allocation5 + $0x10] sm:$0xf]
        %v845 = vld [vmem:[#allocation5 + $0x14] sm:$0xf]
        %v846 = vld [vmem:[#allocation5 + $0x18] sm:$0xf]
        %v847 = vld [vmem:[#allocation5 + $0x1c] sm:$0xf]
        %v848 = vld [vmem:[#allocation5 + $0x20] sm:$0xf]
        %v849 = vld [vmem:[#allocation5 + $0x24] sm:$0xf]
        %v850 = vld [vmem:[#allocation5 + $0x28] sm:$0xf]
        %v851 = vld [vmem:[#allocation5 + $0x2c] sm:$0xf]
        %v852 = vld [vmem:[#allocation5 + $0x30] sm:$0xf]
        %v853 = vld [vmem:[#allocation5 + $0x34] sm:$0xf]
        %v854 = vld [vmem:[#allocation5 + $0x38] sm:$0xf]
        %v855 = vld [vmem:[#allocation5 + $0x3c] sm:$0xf]
        %v872 = vunpack.c.l.b16 %v840
        %v873 = vunpack.c.l.b16 %v841
        %v874 = vunpack.c.l.b16 %v842
        %v875 = vunpack.c.l.b16 %v843
        %v876 = vunpack.c.l.b16 %v844
        %v877 = vunpack.c.l.b16 %v845
        %v878 = vunpack.c.l.b16 %v846
        %v879 = vunpack.c.l.b16 %v847
        %v880 = vunpack.c.l.b16 %v848
        %v881 = vunpack.c.l.b16 %v849
        %v882 = vunpack.c.l.b16 %v850
        %v883 = vunpack.c.l.b16 %v851
        %v884 = vunpack.c.l.b16 %v852
        %v885 = vunpack.c.l.b16 %v853
        %v886 = vunpack.c.l.b16 %v854
        %v887 = vunpack.c.l.b16 %v855
        %v888 = vpack.c.b16 %v873, %v872
        %v889 = vpack.c.b16 %v875, %v874
        %v890 = vpack.c.b16 %v877, %v876
        %v891 = vpack.c.b16 %v879, %v878
        %v892 = vpack.c.b16 %v881, %v880
        %v893 = vpack.c.b16 %v883, %v882
        %v894 = vpack.c.b16 %v885, %v884
        %v895 = vpack.c.b16 %v887, %v886
        %904 = vmatprep.subr.bf16.mxu0 0
        %905 = vmatpush1.bf16.msra.mxu0 %v888
        %906 = vmatprep.subr.bf16.mxu0 0
        %907 = vmatpush1.bf16.msra.mxu0 %v889
        %908 = vmatprep.subr.bf16.mxu0 0
        %909 = vmatpush1.bf16.msra.mxu0 %v890
        %910 = vmatprep.subr.bf16.mxu0 0
        %911 = vmatpush1.bf16.msra.mxu0 %v891
        %912 = vmatprep.subr.bf16.mxu0 0
        %913 = vmatpush1.bf16.msra.mxu0 %v892
        %914 = vmatprep.subr.bf16.mxu0 0
        %915 = vmatpush1.bf16.msra.mxu0 %v893
        %916 = vmatprep.subr.bf16.mxu0 0
        %917 = vmatpush1.bf16.msra.mxu0 %v894
        %918 = vmatprep.subr.bf16.mxu0 0
        %919 = vmatpush1.bf16.msra.mxu0 %v895
        %920 = vmatprep.subr.bf16.mxu0 0
        %921 = vmatpush1.bf16.msra.mxu0 0
        %922 = vmatprep.subr.bf16.mxu0 0
        %923 = vmatpush1.bf16.msra.mxu0 0
        %924 = vmatprep.subr.bf16.mxu0 0
        %925 = vmatpush1.bf16.msra.mxu0 0
        %926 = vmatprep.subr.bf16.mxu0 0
        %927 = vmatpush1.bf16.msra.mxu0 0
        %928 = vmatprep.subr.bf16.mxu0 0
        %929 = vmatpush1.bf16.msra.mxu0 0
        %930 = vmatprep.subr.bf16.mxu0 0
        %931 = vmatpush1.bf16.msra.mxu0 0
        %932 = vmatprep.subr.bf16.mxu0 0
        %933 = vmatpush1.bf16.msra.mxu0 0
        %934 = vmatprep.subr.bf16.mxu0 0
        %935 = vmatpush1.bf16.msra.mxu0 0
        %936 = vmatprep.mubr.bf16.mxu0 0
        %937 = vmatmul.mubr.bf16.gmra.mrb[0].mxu0 %v838
        %v938 = vpop.f32.mrb[0].mxu0
        %v939 = vadd.f32 0.0, %v938
        %v940 = vpop.f32.mrb[0].mxu0
        %v941 = vpop.f32.mrb[0].mxu0
        %v942 = vadd.f32 0.0, %v941
        %v943 = vpop.f32.mrb[0].mxu0
        %944 = vmatprep.mubr.bf16.mxu0 0
        %945 = vmatmul.mubr.bf16.gmra.mrb[0].mxu0 %v839
        %v946 = vpop.f32.mrb[0].mxu0
        %v947 = vadd.f32 0.0, %v946
        %v948 = vpop.f32.mrb[0].mxu0
        %v949 = vpop.f32.mrb[0].mxu0
        %v950 = vadd.f32 0.0, %v949
        %v951 = vpop.f32.mrb[0].mxu0
        %952 = vdwg.mxu0
        %v953 = vpack.c.bf16 %v942, %v939
        %v954 = vpack.c.bf16 %v950, %v947
        %v955 = vld [vmem:[%s4] sm:$0xf]
        %v956 = vld [vmem:[%s4 + $0x4] sm:$0xf]
        %v957 = vld [vmem:[%s4 + $0x8] sm:$0xf]
        %v958 = vld [vmem:[%s4 + $0xc] sm:$0xf]
        %v963 = vunpack.c.l.b16 %v955
        %v964 = vunpack.c.l.b16 %v956
        %v965 = vunpack.c.l.b16 %v957
        %v966 = vunpack.c.l.b16 %v958
        %v967 = vpack.c.b16 %v964, %v963
        %v968 = vpack.c.b16 %v966, %v965
        %v970 = vsel %vm356, %v967, 0
        %v973 = vsel %vm356, %v968, 0
        %975 = vmatprep.subr.bf16.mxu0 0
        %976 = vmatpush1.bf16.msra.mxu0 %v953
        %977 = vmatprep.subr.bf16.mxu0 0
        %978 = vmatpush1.bf16.msra.mxu0 %v954
        %979 = vmatprep.subr.bf16.mxu0 0
        %980 = vmatpush1.bf16.msra.mxu0 0
        %981 = vmatprep.subr.bf16.mxu0 0
        %982 = vmatpush1.bf16.msra.mxu0 0
        %983 = vmatprep.subr.bf16.mxu0 0
        %984 = vmatpush1.bf16.msra.mxu0 0
        %985 = vmatprep.subr.bf16.mxu0 0
        %986 = vmatpush1.bf16.msra.mxu0 0
        %987 = vmatprep.subr.bf16.mxu0 0
        %988 = vmatpush1.bf16.msra.mxu0 0
        %989 = vmatprep.subr.bf16.mxu0 0
        %990 = vmatpush1.bf16.msra.mxu0 0
        %991 = vmatprep.subr.bf16.mxu0 0
        %992 = vmatpush1.bf16.msra.mxu0 0
        %993 = vmatprep.subr.bf16.mxu0 0
        %994 = vmatpush1.bf16.msra.mxu0 0
        %995 = vmatprep.subr.bf16.mxu0 0
        %996 = vmatpush1.bf16.msra.mxu0 0
        %997 = vmatprep.subr.bf16.mxu0 0
        %998 = vmatpush1.bf16.msra.mxu0 0
        %999 = vmatprep.subr.bf16.mxu0 0
        %1000 = vmatpush1.bf16.msra.mxu0 0
        %1001 = vmatprep.subr.bf16.mxu0 0
        %1002 = vmatpush1.bf16.msra.mxu0 0
        %1003 = vmatprep.subr.bf16.mxu0 0
        %1004 = vmatpush1.bf16.msra.mxu0 0
        %1005 = vmatprep.subr.bf16.mxu0 0
        %1006 = vmatpush1.bf16.msra.mxu0 0
        %1007 = vmatprep.mubr.bf16.mxu0 0
        %1008 = vmatmul.mubr.bf16.gmra.mrb[0].mxu0 %v970
        %v1009 = vpop.f32.mrb[0].mxu0
        %v1010 = vadd.f32 0.0, %v1009
        %v1011 = vpop.f32.mrb[0].mxu0
        %v1012 = vpop.f32.mrb[0].mxu0
        %v1013 = vadd.f32 0.0, %v1012
        %v1014 = vpop.f32.mrb[0].mxu0
        %1015 = vmatprep.mubr.bf16.mxu0 0
        %1016 = vmatmul.mubr.bf16.gmra.mrb[0].mxu0 %v973
        %v1017 = vpop.f32.mrb[0].mxu0
        %v1018 = vadd.f32 0.0, %v1017
        %v1019 = vpop.f32.mrb[0].mxu0
        %v1020 = vpop.f32.mrb[0].mxu0
        %v1021 = vadd.f32 0.0, %v1020
        %v1022 = vpop.f32.mrb[0].mxu0
        %1023 = vdwg.mxu0
        %v1024 = vadd.f32 %v464, %v1010
        %v1025 = vadd.f32 %v467, %v1013
        %v1026 = vadd.f32 %v472, %v1018
        %v1027 = vadd.f32 %v475, %v1021
        %s1028 = scalar_lea.vmem %s4, 16
        %v1029 = vld [vmem:[%s1028] sm:$0xf]
        %v1030 = vld [vmem:[%s1028 + $0x4] sm:$0xf]
        %v1031 = vld [vmem:[%s1028 + $0x8] sm:$0xf]
        %v1032 = vld [vmem:[%s1028 + $0xc] sm:$0xf]
        %v1037 = vunpack.c.l.b16 %v1029
        %v1038 = vunpack.c.l.b16 %v1030
        %v1039 = vunpack.c.l.b16 %v1031
        %v1040 = vunpack.c.l.b16 %v1032
        %v1041 = vpack.c.b16 %v1038, %v1037
        %v1042 = vpack.c.b16 %v1040, %v1039
        %v1044 = vsel %vm356, %v1041, 0
        %v1047 = vsel %vm356, %v1042, 0
        %1049 = vmatprep.subr.bf16.mxu0 0
        %1050 = vmatpush1.bf16.msra.mxu0 %v838
        %1051 = vmatprep.subr.bf16.mxu0 0
        %1052 = vmatpush1.bf16.msra.mxu0 %v839
        %1053 = vmatprep.subr.bf16.mxu0 0
        %1054 = vmatpush1.bf16.msra.mxu0 0
        %1055 = vmatprep.subr.bf16.mxu0 0
        %1056 = vmatpush1.bf16.msra.mxu0 0
        %1057 = vmatprep.subr.bf16.mxu0 0
        %1058 = vmatpush1.bf16.msra.mxu0 0
        %1059 = vmatprep.subr.bf16.mxu0 0
        %1060 = vmatpush1.bf16.msra.mxu0 0
        %1061 = vmatprep.subr.bf16.mxu0 0
        %1062 = vmatpush1.bf16.msra.mxu0 0
        %1063 = vmatprep.subr.bf16.mxu0 0
        %1064 = vmatpush1.bf16.msra.mxu0 0
        %1065 = vmatprep.subr.bf16.mxu0 0
        %1066 = vmatpush1.bf16.msra.mxu0 0
        %1067 = vmatprep.subr.bf16.mxu0 0
        %1068 = vmatpush1.bf16.msra.mxu0 0
        %1069 = vmatprep.subr.bf16.mxu0 0
        %1070 = vmatpush1.bf16.msra.mxu0 0
        %1071 = vmatprep.subr.bf16.mxu0 0
        %1072 = vmatpush1.bf16.msra.mxu0 0
        %1073 = vmatprep.subr.bf16.mxu0 0
        %1074 = vmatpush1.bf16.msra.mxu0 0
        %1075 = vmatprep.subr.bf16.mxu0 0
        %1076 = vmatpush1.bf16.msra.mxu0 0
        %1077 = vmatprep.subr.bf16.mxu0 0
        %1078 = vmatpush1.bf16.msra.mxu0 0
        %1079 = vmatprep.subr.bf16.mxu0 0
        %1080 = vmatpush1.bf16.msra.mxu0 0
        %1081 = vmatprep.mubr.bf16.mxu0 0
        %1082 = vmatmul.mubr.bf16.gmra.mrb[0].mxu0 %v1044
        %v1083 = vpop.f32.mrb[0].mxu0
        %v1084 = vadd.f32 0.0, %v1083
        %v1085 = vpop.f32.mrb[0].mxu0
        %v1086 = vpop.f32.mrb[0].mxu0
        %v1087 = vadd.f32 0.0, %v1086
        %v1088 = vpop.f32.mrb[0].mxu0
        %1089 = vmatprep.mubr.bf16.mxu0 0
        %1090 = vmatmul.mubr.bf16.gmra.mrb[0].mxu0 %v1047
        %v1091 = vpop.f32.mrb[0].mxu0
        %v1092 = vadd.f32 0.0, %v1091
        %v1093 = vpop.f32.mrb[0].mxu0
        %v1094 = vpop.f32.mrb[0].mxu0
        %v1095 = vadd.f32 0.0, %v1094
        %v1096 = vpop.f32.mrb[0].mxu0
        %1097 = vdwg.mxu0
        %v1098 = vadd.f32 %v1024, %v1084
        %v1099 = vadd.f32 %v1025, %v1087
        %v1100 = vadd.f32 %v1026, %v1092
        %v1101 = vadd.f32 %v1027, %v1095
        %s1102 = scalar_lea.vmem [#allocation5], 64
        %v1103 = vld [vmem:[%s1102] sm:$0xf]
        %v1104 = vld [vmem:[%s1102 + $0x4] sm:$0xf]
        %v1105 = vld [vmem:[%s1102 + $0x8] sm:$0xf]
        %v1106 = vld [vmem:[%s1102 + $0xc] sm:$0xf]
        %v1107 = vld [vmem:[%s1102 + $0x10] sm:$0xf]
        %v1108 = vld [vmem:[%s1102 + $0x14] sm:$0xf]
        %v1109 = vld [vmem:[%s1102 + $0x18] sm:$0xf]
        %v1110 = vld [vmem:[%s1102 + $0x1c] sm:$0xf]
        %v1111 = vld [vmem:[%s1102 + $0x20] sm:$0xf]
        %v1112 = vld [vmem:[%s1102 + $0x24] sm:$0xf]
        %v1113 = vld [vmem:[%s1102 + $0x28] sm:$0xf]
        %v1114 = vld [vmem:[%s1102 + $0x2c] sm:$0xf]
        %v1115 = vld [vmem:[%s1102 + $0x30] sm:$0xf]
        %v1116 = vld [vmem:[%s1102 + $0x34] sm:$0xf]
        %v1117 = vld [vmem:[%s1102 + $0x38] sm:$0xf]
        %v1118 = vld [vmem:[%s1102 + $0x3c] sm:$0xf]
        %v1135 = vunpack.c.l.b16 %v1103
        %v1136 = vunpack.c.l.b16 %v1104
        %v1137 = vunpack.c.l.b16 %v1105
        %v1138 = vunpack.c.l.b16 %v1106
        %v1139 = vunpack.c.l.b16 %v1107
        %v1140 = vunpack.c.l.b16 %v1108
        %v1141 = vunpack.c.l.b16 %v1109
        %v1142 = vunpack.c.l.b16 %v1110
        %v1143 = vunpack.c.l.b16 %v1111
        %v1144 = vunpack.c.l.b16 %v1112
        %v1145 = vunpack.c.l.b16 %v1113
        %v1146 = vunpack.c.l.b16 %v1114
        %v1147 = vunpack.c.l.b16 %v1115
        %v1148 = vunpack.c.l.b16 %v1116
        %v1149 = vunpack.c.l.b16 %v1117
        %v1150 = vunpack.c.l.b16 %v1118
        %v1151 = vpack.c.b16 %v1136, %v1135
        %v1152 = vpack.c.b16 %v1138, %v1137
        %v1153 = vpack.c.b16 %v1140, %v1139
        %v1154 = vpack.c.b16 %v1142, %v1141
        %v1155 = vpack.c.b16 %v1144, %v1143
        %v1156 = vpack.c.b16 %v1146, %v1145
        %v1157 = vpack.c.b16 %v1148, %v1147
        %v1158 = vpack.c.b16 %v1150, %v1149
        %1167 = vmatprep.subr.bf16.mxu0 0
        %1168 = vmatpush1.bf16.msra.mxu0 %v1151
        %1169 = vmatprep.subr.bf16.mxu0 0
        %1170 = vmatpush1.bf16.msra.mxu0 %v1152
        %1171 = vmatprep.subr.bf16.mxu0 0
        %1172 = vmatpush1.bf16.msra.mxu0 %v1153
        %1173 = vmatprep.subr.bf16.mxu0 0
        %1174 = vmatpush1.bf16.msra.mxu0 %v1154
        %1175 = vmatprep.subr.bf16.mxu0 0
        %1176 = vmatpush1.bf16.msra.mxu0 %v1155
        %1177 = vmatprep.subr.bf16.mxu0 0
        %1178 = vmatpush1.bf16.msra.mxu0 %v1156
        %1179 = vmatprep.subr.bf16.mxu0 0
        %1180 = vmatpush1.bf16.msra.mxu0 %v1157
        %1181 = vmatprep.subr.bf16.mxu0 0
        %1182 = vmatpush1.bf16.msra.mxu0 %v1158
        %1183 = vmatprep.subr.bf16.mxu0 0
        %1184 = vmatpush1.bf16.msra.mxu0 0
        %1185 = vmatprep.subr.bf16.mxu0 0
        %1186 = vmatpush1.bf16.msra.mxu0 0
        %1187 = vmatprep.subr.bf16.mxu0 0
        %1188 = vmatpush1.bf16.msra.mxu0 0
        %1189 = vmatprep.subr.bf16.mxu0 0
        %1190 = vmatpush1.bf16.msra.mxu0 0
        %1191 = vmatprep.subr.bf16.mxu0 0
        %1192 = vmatpush1.bf16.msra.mxu0 0
        %1193 = vmatprep.subr.bf16.mxu0 0
        %1194 = vmatpush1.bf16.msra.mxu0 0
        %1195 = vmatprep.subr.bf16.mxu0 0
        %1196 = vmatpush1.bf16.msra.mxu0 0
        %1197 = vmatprep.subr.bf16.mxu0 0
        %1198 = vmatpush1.bf16.msra.mxu0 0
        %1199 = vmatprep.mubr.bf16.mxu0 0
        %1200 = vmatmul.mubr.bf16.gmra.mrb[0].mxu0 %v838
        %v1201 = vpop.f32.mrb[0].mxu0
        %v1202 = vadd.f32 0.0, %v1201
        %v1203 = vpop.f32.mrb[0].mxu0
        %v1204 = vpop.f32.mrb[0].mxu0
        %v1205 = vadd.f32 0.0, %v1204
        %v1206 = vpop.f32.mrb[0].mxu0
        %1207 = vmatprep.mubr.bf16.mxu0 0
        %1208 = vmatmul.mubr.bf16.gmra.mrb[0].mxu0 %v839
        %v1209 = vpop.f32.mrb[0].mxu0
        %v1210 = vadd.f32 0.0, %v1209
        %v1211 = vpop.f32.mrb[0].mxu0
        %v1212 = vpop.f32.mrb[0].mxu0
        %v1213 = vadd.f32 0.0, %v1212
        %v1214 = vpop.f32.mrb[0].mxu0
        %1215 = vdwg.mxu0
        %v1216 = vpack.c.bf16 %v1205, %v1202
        %v1217 = vpack.c.bf16 %v1213, %v1210
        %s1218 = scalar_lea.vmem %s4, 32
        %v1219 = vld [vmem:[%s1218] sm:$0xf]
        %v1220 = vld [vmem:[%s1218 + $0x4] sm:$0xf]
        %v1221 = vld [vmem:[%s1218 + $0x8] sm:$0xf]
        %v1222 = vld [vmem:[%s1218 + $0xc] sm:$0xf]
        %v1227 = vunpack.c.l.b16 %v1219
        %v1228 = vunpack.c.l.b16 %v1220
        %v1229 = vunpack.c.l.b16 %v1221
        %v1230 = vunpack.c.l.b16 %v1222
        %v1231 = vpack.c.b16 %v1228, %v1227
        %v1232 = vpack.c.b16 %v1230, %v1229
        %v1234 = vsel %vm356, %v1231, 0
        %v1237 = vsel %vm356, %v1232, 0
        %1239 = vmatprep.subr.bf16.mxu0 0
        %1240 = vmatpush1.bf16.msra.mxu0 %v1216
        %1241 = vmatprep.subr.bf16.mxu0 0
        %1242 = vmatpush1.bf16.msra.mxu0 %v1217
        %1243 = vmatprep.subr.bf16.mxu0 0
        %1244 = vmatpush1.bf16.msra.mxu0 0
        %1245 = vmatprep.subr.bf16.mxu0 0
        %1246 = vmatpush1.bf16.msra.mxu0 0
        %1247 = vmatprep.subr.bf16.mxu0 0
        %1248 = vmatpush1.bf16.msra.mxu0 0
        %1249 = vmatprep.subr.bf16.mxu0 0
        %1250 = vmatpush1.bf16.msra.mxu0 0
        %1251 = vmatprep.subr.bf16.mxu0 0
        %1252 = vmatpush1.bf16.msra.mxu0 0
        %1253 = vmatprep.subr.bf16.mxu0 0
        %1254 = vmatpush1.bf16.msra.mxu0 0
        %1255 = vmatprep.subr.bf16.mxu0 0
        %1256 = vmatpush1.bf16.msra.mxu0 0
        %1257 = vmatprep.subr.bf16.mxu0 0
        %1258 = vmatpush1.bf16.msra.mxu0 0
        %1259 = vmatprep.subr.bf16.mxu0 0
        %1260 = vmatpush1.bf16.msra.mxu0 0
        %1261 = vmatprep.subr.bf16.mxu0 0
        %1262 = vmatpush1.bf16.msra.mxu0 0
        %1263 = vmatprep.subr.bf16.mxu0 0
        %1264 = vmatpush1.bf16.msra.mxu0 0
        %1265 = vmatprep.subr.bf16.mxu0 0
        %1266 = vmatpush1.bf16.msra.mxu0 0
        %1267 = vmatprep.subr.bf16.mxu0 0
        %1268 = vmatpush1.bf16.msra.mxu0 0
        %1269 = vmatprep.subr.bf16.mxu0 0
        %1270 = vmatpush1.bf16.msra.mxu0 0
        %1271 = vmatprep.mubr.bf16.mxu0 0
        %1272 = vmatmul.mubr.bf16.gmra.mrb[0].mxu0 %v1234
        %v1273 = vpop.f32.mrb[0].mxu0
        %v1274 = vadd.f32 0.0, %v1273
        %v1275 = vpop.f32.mrb[0].mxu0
        %v1276 = vpop.f32.mrb[0].mxu0
        %v1277 = vadd.f32 0.0, %v1276
        %v1278 = vpop.f32.mrb[0].mxu0
        %1279 = vmatprep.mubr.bf16.mxu0 0
        %1280 = vmatmul.mubr.bf16.gmra.mrb[0].mxu0 %v1237
        %v1281 = vpop.f32.mrb[0].mxu0
        %v1282 = vadd.f32 0.0, %v1281
        %v1283 = vpop.f32.mrb[0].mxu0
        %v1284 = vpop.f32.mrb[0].mxu0
        %v1285 = vadd.f32 0.0, %v1284
        %v1286 = vpop.f32.mrb[0].mxu0
        %1287 = vdwg.mxu0
        %v1288 = vadd.f32 %v1098, %v1274
        %v1289 = vadd.f32 %v1099, %v1277
        %v1290 = vadd.f32 %v1100, %v1282
        %v1291 = vadd.f32 %v1101, %v1285
        %v1292 = vmax.f32 %v1288, 0.0
        %v1293 = vmax.f32 %v1289, 0.0
        %v1294 = vmax.f32 %v1290, 0.0
        %v1295 = vmax.f32 %v1291, 0.0
        %1296 = vst [vmem:[%s275] sm:$0xff] %v1292
        %1297 = vst [vmem:[%s275 + $0x8] sm:$0xff] %v1293
        %1298 = vst [vmem:[%s275 + $0x10] sm:$0xff] %v1294
        %1299 = vst [vmem:[%s275 + $0x18] sm:$0xff] %v1295
        %s1300 = sand.u32 %s161, 1
        %s1301 = scalar_lea.sflag [#allocation4], %s1300
        %s1302 = sand.u32 %s161, 1
        %s1303 = smul.addr %s1302, 32
        %s1304 = scalar_lea.vmem [#allocation7], %s1303
        // Predicated region
        $region53: #{tpu_custom_call.1} parent=43 // pred_check
          %p1305 = pneg %p171
        $region54: #{tpu_custom_call.1} parent=43 // pred_check_branch
          %1307 = sbr.rel (%p1305) target = $region56
        $region55: #{tpu_custom_call.1} parent=43 // pred_region
          %s1308 = smul.u32 4, %s22
          %s1310 = ssub.s32 512, 512
          %1311 = vsyncadd %s1301, %s1310
          %s1312 = smul.addr %s1308, 128
          %s1313 = scalar_lea.hbm %s6, %s1312
          %s1314 = sshll.u32 %s1304, 4
          %s1315 = int_to_ptr.vmem [resolvable:$true] %s1314
          %1320 = dma.vmem_to_hbm [thread:$0]  %s1315, 512, %s1313, %s1301, 128, 128, 8
        $region56: #{tpu_custom_call.1} parent=43 // pred_fallthru
          _
      $region44: #{tpu_custom_call.1} parent=5 // pred_fallthru
        _
      %p1321 = scmp.le.s32.totalorder 2, %s17
      // Predicated region
      $region57: #{tpu_custom_call.1} parent=5 // pred_check
        %p1322 = pneg %p1321
      $region58: #{tpu_custom_call.1} parent=5 // pred_check_branch
        %1324 = sbr.rel (%p1322) target = $region60
      $region59: #{tpu_custom_call.1} parent=5 // pred_region
        %s1325 = ssub.s32 %s17, 2
        // Predicated region
        $region61: #{tpu_custom_call.1} parent=59 // pred_check
          %p1326 = pneg %p177
        $region62: #{tpu_custom_call.1} parent=59 // pred_check_branch
          %1328 = sbr.rel (%p1326) target = $region64
        $region63: #{tpu_custom_call.1} parent=59 // pred_region
          %s1329 = sand.u32 %s162, 1
          %s1330 = scalar_lea.sflag [#allocation4], %s1329
          %s1331 = sand.u32 %s162, 1
          %s1332 = smul.addr %s1331, 32
          %s1333 = scalar_lea.vmem [#allocation7], %s1332
          %1334 = dma.done %s1330, 512
        $region64: #{tpu_custom_call.1} parent=59 // pred_fallthru
          _
      $region60: #{tpu_custom_call.1} parent=5 // pred_fallthru
        _
    $region6: #{tpu_custom_call.1} parent=1 // loop_footer
      %s21 = sadd.s32 1, %s17
    $region7: #{tpu_custom_call.1} parent=1 // loop_footer_branch
      %16 = sbr.rel target = $region3
    $region8: #{tpu_custom_call.1} parent=1 // loop_exit
      _
    %1335 = vsyncpa [#allocation3], 1
    %s1336 = scalar_lea.sflag [#allocation3], 1
    %1337 = vsyncpa %s1336, 1
    %1338 = vsyncpa [#allocation6], 1
    %1339 = vsyncpa [#allocation4], 1
    %s1340 = scalar_lea.sflag [#allocation4], 1
    %1341 = vsyncpa %s1340, 1

</llo_original>
